<compile_context>
chip_gen: v5e
topology: v5e:2x2
jax: 0.10.0
libtpu: 0.0.40
codegen_flags: <defaults>
</compile_context>

<pallas_src>
import functools

import numpy as np
import jax
import jax.numpy as jnp
from jax.experimental import pallas as pl
from jax.experimental.pallas import tpu as pltpu


# ----------------------------------------------------------------------------
# small helpers
# ----------------------------------------------------------------------------
def _round_up(x, m):
    return ((x + m - 1) // m) * m


def _padded_bytes(shape, itemsize=4):
    """VMEM footprint of an f32 tile with (8,128) padding on the minor dims."""
    lanes = _round_up(shape[-1], 128)
    subl = _round_up(shape[-2] if len(shape) >= 2 else 1, 8)
    lead = int(np.prod(shape[:-2])) if len(shape) > 2 else 1
    return lead * subl * lanes * itemsize


def _chunk_vmem_bytes(tc, bhalf, inp, hid, group):
    """Rough per-chunk VMEM footprint (double-buffered pipeline blocks)."""
    x_b = _padded_bytes((1, tc * bhalf, inp))
    t_b = _padded_bytes((tc, bhalf, 1))
    his_b = _padded_bytes((tc // group, bhalf, group * hid))
    fin_b = 2 * _padded_bytes((bhalf, hid))
    w_b = (_padded_bytes((inp, 4 * hid)) + _padded_bytes((2 * hid, 5 * hid))
           + _padded_bytes((1, 4 * hid)) + _padded_bytes((1, hid)))
    scr_b = 2 * _padded_bytes((bhalf, hid)) + _padded_bytes((tc * bhalf, 4 * hid))
    return 2 * (x_b + t_b + his_b + fin_b + w_b) + scr_b


def _pick_chunk(seq_len, bhalf, inp, hid, group,
                budget_bytes=44 * 1024 * 1024, cap=128):
    """Largest multiple of `group` (<= cap, >= group) whose chunk fits VMEM."""
    limit = max(group, min(_round_up(seq_len, group), _round_up(cap, group)))
    best = group
    tc = group
    while tc <= limit:
        if _chunk_vmem_bytes(tc, bhalf, inp, hid, group) <= budget_bytes:
            best = tc
        tc += group
    return best


# ----------------------------------------------------------------------------
# Pallas kernel: one direction block x one chunk of timesteps
# ----------------------------------------------------------------------------
def _tlstm_kernel(x_ref, t_ref, wcat_ref, wrec_ref, bcat_ref, bd_ref,
                  his_ref, hfin_ref, cfin_ref,
                  h_sc, c_sc, xw_sc, *,
                  seq_len, group, unroll):
    chunk = pl.program_id(1)
    t_chunk, bp, _ = t_ref.shape
    H = bd_ref.shape[1]
    n_groups = t_chunk // group

    @pl.when(chunk == 0)
    def _():
        h_sc[...] = jnp.zeros_like(h_sc)
        c_sc[...] = jnp.zeros_like(c_sc)

    # --- hoisted input projection: one big-M MXU matmul per chunk ----------
    # x_ref block is (1, t_chunk*bp, I) so no in-kernel reshape is needed.
    xw_sc[...] = (jnp.dot(x_ref[0], wcat_ref[...],
                          preferred_element_type=jnp.float32)
                  + bcat_ref[...])                                  # (Tc*Bp, 4H)

    wrec = wrec_ref[...]          # (2H, 5H) block-diag [Ucat ; W_decomp]
    bd = bd_ref[...]              # (1, H)

    def group_step(g, carry):
        h, c = carry                               # (Bp, H) each
        hs = []
        for j in range(group):                     # static inner unroll
            i = g * group + j

            # single recurrent matmul: gates + decomp pre-activations together
            hc = jnp.concatenate([h, c], axis=-1)                  # (Bp, 2H)
            rec = jnp.dot(hc, wrec, preferred_element_type=jnp.float32)  # (Bp,5H)

            # map_elapse_time (exact divide: feeds the serial recurrence)
            T = 1.0 / jnp.log(t_ref[i] + jnp.float32(np.e))        # (Bp, 1)
            C_ST = jnp.tanh(rec[:, 4 * H:] + bd)
            c_adj = c - C_ST + T * C_ST

            row = pl.multiple_of(i * bp, 8)
            gates = jax.nn.sigmoid(xw_sc[pl.ds(row, bp), :] + rec[:, :4 * H])
            i_g = gates[:, 0 * H:1 * H]
            f_g = gates[:, 1 * H:2 * H]
            o_g = gates[:, 2 * H:3 * H]
            c_g = gates[:, 3 * H:4 * H]   # sigmoid candidate (reference quirk)

            c = f_g * c_adj + i_g * c_g
            h = o_g * jnp.tanh(c)
            hs.append(h)

            # final (h, c) written exactly once, at the last *real* timestep
            # (the sequence may be padded to a multiple of t_chunk).
            @pl.when(chunk * t_chunk + i == seq_len - 1)
            def _(h=h, c=c):
                hfin_ref[...] = h
                cfin_ref[...] = c

        # lane-dense history store: one (Bp, group*H) slab per `group` steps
        his_ref[g] = jnp.concatenate(hs, axis=-1)
        return h, c

    h_last, c_last = jax.lax.fori_loop(
        0, n_groups, group_step, (h_sc[...], c_sc[...]), unroll=unroll)

    # persist recurrent state across chunks
    h_sc[...] = h_last
    c_sc[...] = c_last


# ----------------------------------------------------------------------------
# Wrapper reproducing TLSTM.forward (batch_first=True, bidirectional=True)
# ----------------------------------------------------------------------------
def tlstm_forward(inputs, times, params):
    """inputs: (B, S, I) float32, times: (B, S, 1) float32."""
    B, S, I = inputs.shape
    H = params["Wi"].shape[1]

    # --- fused weights (host-side, once) -----------------------------------
    Wcat = jnp.concatenate(
        [params["Wi"], params["Wf"], params["Wog"], params["Wc"]], axis=1)   # (I,4H)
    Ucat = jnp.concatenate(
        [params["Ui"], params["Uf"], params["Uog"], params["Uc"]], axis=1)   # (H,4H)
    # block-diagonal recurrent weight: [h, c] @ Wrec -> [gate_pre | decomp_pre]
    Wrec = jnp.zeros((2 * H, 5 * H), jnp.float32)
    Wrec = Wrec.at[:H, :4 * H].set(Ucat)
    Wrec = Wrec.at[H:, 4 * H:].set(params["W_decomp"])
    bcat = jnp.concatenate(
        [params["bi"], params["bf"], params["bog"], params["bc"]]).reshape(1, 4 * H)
    bd = params["b_decomp"].reshape(1, H)

    # --- time-major inputs, per-direction ----------------------------------
    xs = jnp.transpose(inputs, (1, 0, 2))    # (S, B, I)
    ts = jnp.transpose(times, (1, 0, 2))     # (S, B, 1)
    # backward direction: inputs time-reversed; time quirk from the reference:
    #   step 0 uses times[0], step i>0 uses flipped_times[i-1] == times[S-i]
    xs_b = jnp.flip(xs, axis=0)
    ts_b = jnp.concatenate([ts[0:1], jnp.flip(ts[1:], axis=0)], axis=0)
    # TODO(synk): read the un-flipped HBM buffer via reversed index_maps to
    # avoid materializing the flipped copy for very large S*B*I.

    group = max(1, 128 // H)                 # steps packed per history store
    Bhalf = _round_up(B, 8)                  # per-direction padded batch rows
    t_chunk = _pick_chunk(S, Bhalf, I, H, group)
    S_pad = _round_up(S, t_chunk)
    n_chunks = S_pad // t_chunk
    groups_per_chunk = t_chunk // group
    n_groups_total = S_pad // group

    def prep(a, pad_val):
        # (S, B, d) -> (S_pad, Bhalf, d); padded rows/steps are discarded later
        return jnp.pad(a, ((0, S_pad - S), (0, Bhalf - B), (0, 0)),
                       constant_values=pad_val)

    Xf, Xb = prep(xs, 0.0), prep(xs_b, 0.0)
    Tf, Tb = prep(ts, 1.0), prep(ts_b, 1.0)

    # X: direction-major, time/batch rows pre-flattened so the kernel's input
    # projection needs no in-kernel reshape.   (2, S_pad*Bhalf, I)
    X = jnp.stack([Xf, Xb], axis=0).reshape(2, S_pad * Bhalf, I)
    # T: time-major with both directions stacked in the batch dim.
    Tm = jnp.concatenate([Tf, Tb], axis=1)                  # (S_pad, 2*Bhalf, 1)

    Bp2 = 2 * Bhalf
    est = _chunk_vmem_bytes(t_chunk, Bhalf, I, H, group)
    vmem_limit = int(min(48 * 1024 * 1024, max(32 * 1024 * 1024, 2 * est)))
    # full unroll only while the per-step live set comfortably fits 64 vregs
    unroll = bool(t_chunk <= 32 and Bhalf <= 64 and H <= 128)

    out_shape = (
        jax.ShapeDtypeStruct((n_groups_total, Bp2, group * H), jnp.float32),
        jax.ShapeDtypeStruct((Bp2, H), jnp.float32),
        jax.ShapeDtypeStruct((Bp2, H), jnp.float32),
    )
    grid_spec = pltpu.PrefetchScalarGridSpec(
        num_scalar_prefetch=0,
        grid=(2, n_chunks),                      # (direction, time chunks)
        in_specs=[
            pl.BlockSpec((1, t_chunk * Bhalf, I), lambda d, s: (d, s, 0)),   # X
            pl.BlockSpec((t_chunk, Bhalf, 1), lambda d, s: (s, d, 0)),       # T
            # TODO(synk): single-buffer these grid-invariant weights
            # (pl.Buffered(1) / manual DMA) to reclaim the duplicate copy.
            pl.BlockSpec((I, 4 * H), lambda d, s: (0, 0)),                   # Wcat
            pl.BlockSpec((2 * H, 5 * H), lambda d, s: (0, 0)),               # Wrec
            pl.BlockSpec((1, 4 * H), lambda d, s: (0, 0)),                   # bcat
            pl.BlockSpec((1, H), lambda d, s: (0, 0)),                       # bd
        ],
        out_specs=(
            pl.BlockSpec((groups_per_chunk, Bhalf, group * H),
                         lambda d, s: (s, d, 0)),                            # his
            pl.BlockSpec((Bhalf, H), lambda d, s: (d, 0)),                   # h_fin
            pl.BlockSpec((Bhalf, H), lambda d, s: (d, 0)),                   # c_fin
        ),
        scratch_shapes=[
            pltpu.VMEM((Bhalf, H), jnp.float32),                  # h carry
            pltpu.VMEM((Bhalf, H), jnp.float32),                  # c carry
            pltpu.VMEM((t_chunk * Bhalf, 4 * H), jnp.float32),    # hoisted XW
        ],
    )

    kernel = functools.partial(_tlstm_kernel, seq_len=S, group=group,
                               unroll=unroll)
    his_p, h_fin, c_fin = pl.pallas_call(
        kernel,
        out_shape=out_shape,
        grid_spec=grid_spec,
        compiler_params=pltpu.CompilerParams(
            dimension_semantics=("parallel", "arbitrary"),
            vmem_limit_bytes=vmem_limit),
    )(X, Tm, Wcat, Wrec, bcat, bd)

    # --- unpack lane-packed history: (S_pad//G, 2Bh, G*H) -> (S_pad, 2Bh, H)
    his = his_p.reshape(n_groups_total, Bp2, group, H)
    his = jnp.transpose(his, (0, 2, 1, 3)).reshape(S_pad, Bp2, H)
    his = his[:S]

    his_f = his[:, :B]                          # forward, time order
    his_b = his[:, Bhalf:Bhalf + B]             # backward, processing order
    hidden_his = jnp.concatenate([his_f, his_b], axis=2)    # (S, B, 2H)
    hidden_his = jnp.transpose(hidden_his, (1, 0, 2))        # batch_first

    h_out = jnp.concatenate([h_fin[:B], h_fin[Bhalf:Bhalf + B]], axis=1)  # (B,2H)
    c_out = jnp.concatenate([c_fin[:B], c_fin[Bhalf:Bhalf + B]], axis=1)  # (B,2H)
    return hidden_his, (h_out, c_out)


# ----------------------------------------------------------------------------
# Pure-JAX reference (mirror of the PyTorch forward) for verification
# ----------------------------------------------------------------------------
def _tlstm_unit_ref(h, c, x, t, p):
    T = 1.0 / jnp.log(t + np.e)                       # (B, 1)
    C_ST = jnp.tanh(c @ p["W_decomp"] + p["b_decomp"])
    c = c - C_ST + T * C_ST
    i = jax.nn.sigmoid(x @ p["Wi"] + h @ p["Ui"] + p["bi"])
    f = jax.nn.sigmoid(x @ p["Wf"] + h @ p["Uf"] + p["bf"])
    o = jax.nn.sigmoid(x @ p["Wog"] + h @ p["Uog"] + p["bog"])
    C = jax.nn.sigmoid(x @ p["Wc"] + h @ p["Uc"] + p["bc"])
    Ct = f * c + i * C
    return o * jnp.tanh(Ct), Ct


def tlstm_reference(inputs, times, params):
    B, S, I = inputs.shape
    H = params["Wi"].shape[1]
    xs = jnp.transpose(inputs, (1, 0, 2))
    ts = jnp.transpose(times, (1, 0, 2))

    def run(xs_d, ts_d):
        h = jnp.zeros((B, H), jnp.float32)
        c = jnp.zeros((B, H), jnp.float32)
        his = []
        for s in range(S):
            h, c = _tlstm_unit_ref(h, c, xs_d[s], ts_d[s], params)
            his.append(h)
        return jnp.stack(his), h, c

    his_f, h_f, c_f = run(xs, ts)
    xs_b = jnp.flip(xs, axis=0)
    ts_b = jnp.concatenate([ts[0:1], jnp.flip(ts[1:], axis=0)], axis=0)
    his_b, h_b, c_b = run(xs_b, ts_b)

    his = jnp.concatenate([his_f, his_b], axis=2)
    return (jnp.transpose(his, (1, 0, 2)),
            (jnp.concatenate([h_f, h_b], axis=1),
             jnp.concatenate([c_f, c_b], axis=1)))


# ----------------------------------------------------------------------------
def _init_params(key, input_size, hidden_size, initializer_range=0.02):
    names_w = ["Wi", "Wf", "Wog", "Wc"]
    names_u = ["Ui", "Uf", "Uog", "Uc"]
    params = {}
    keys = jax.random.split(key, 9)
    for k, n in zip(keys[:4], names_w):
        params[n] = initializer_range * jax.random.normal(
            k, (input_size, hidden_size), jnp.float32)
    for k, n in zip(keys[4:8], names_u):
        params[n] = initializer_range * jax.random.normal(
            k, (hidden_size, hidden_size), jnp.float32)
    params["W_decomp"] = initializer_range * jax.random.normal(
        keys[8], (hidden_size, hidden_size), jnp.float32)
    for n in ["bi", "bf", "bog", "bc", "b_decomp"]:
        params[n] = jnp.zeros((hidden_size,), jnp.float32)
    return params


if __name__ == "__main__":
    B, S, I, H = 2, 8, 8, 32

    key = jax.random.PRNGKey(0)
    k_par, k_x, k_t = jax.random.split(key, 3)

    params = _init_params(k_par, I, H)
    inputs = jax.random.normal(k_x, (B, S, I), jnp.float32)
    # elapsed times must be positive (they go through log(t + e))
    times = jax.random.uniform(k_t, (B, S, 1), jnp.float32,
                               minval=0.1, maxval=10.0)

    his, (h_fin, c_fin) = tlstm_forward(inputs, times, params)
    jax.block_until_ready((his, h_fin, c_fin))

    his_ref, (h_ref, c_ref) = tlstm_reference(inputs, times, params)
    np.testing.assert_allclose(np.asarray(his), np.asarray(his_ref),
                               rtol=2e-3, atol=2e-3)
    np.testing.assert_allclose(np.asarray(h_fin), np.asarray(h_ref),
                               rtol=2e-3, atol=2e-3)
    np.testing.assert_allclose(np.asarray(c_fin), np.asarray(c_ref),
                               rtol=2e-3, atol=2e-3)

    print("KERNEL_OK")
</pallas_src>

<mosaic_0001>
module attributes {stable_mosaic.version = 11 : i64} {
  func.func @_tlstm_kernel(%arg0: i32, %arg1: i32, %arg2: memref<1x64x8xf32, #tpu.memory_space<vmem>>, %arg3: memref<8x8x1xf32, #tpu.memory_space<vmem>>, %arg4: memref<8x128xf32, #tpu.memory_space<vmem>>, %arg5: memref<64x160xf32, #tpu.memory_space<vmem>>, %arg6: memref<1x128xf32, #tpu.memory_space<vmem>>, %arg7: memref<1x32xf32, #tpu.memory_space<vmem>>, %arg8: memref<2x8x128xf32, #tpu.memory_space<vmem>>, %arg9: memref<8x32xf32, #tpu.memory_space<vmem>>, %arg10: memref<8x32xf32, #tpu.memory_space<vmem>>, %arg11: memref<8x32xf32, #tpu.memory_space<vmem>>, %arg12: memref<8x32xf32, #tpu.memory_space<vmem>>, %arg13: memref<64x128xf32, #tpu.memory_space<vmem>>) attributes {dimension_semantics = [#tpu.dimension_semantics<parallel>, #tpu.dimension_semantics<arbitrary>], iteration_bounds = array<i64: 2, 1>, scalar_prefetch = 0 : i64, scratch_operands = 3 : i64, tpu.core_type = #tpu.core_type<tc>, window_params = [{transform_indices = @transform_0, window_bounds = array<i64: 1, 64, 8>}, {transform_indices = @transform_1, window_bounds = array<i64: 8, 8, 1>}, {pipeline_mode = #tpu.pipeline_mode<synchronous>, transform_indices = @transform_2, window_bounds = array<i64: 8, 128>}, {pipeline_mode = #tpu.pipeline_mode<synchronous>, transform_indices = @transform_3, window_bounds = array<i64: 64, 160>}, {pipeline_mode = #tpu.pipeline_mode<synchronous>, transform_indices = @transform_4, window_bounds = array<i64: 1, 128>}, {pipeline_mode = #tpu.pipeline_mode<synchronous>, transform_indices = @transform_5, window_bounds = array<i64: 1, 32>}, {transform_indices = @transform_6, window_bounds = array<i64: 2, 8, 128>}, {transform_indices = @transform_7, window_bounds = array<i64: 8, 32>}, {transform_indices = @transform_8, window_bounds = array<i64: 8, 32>}]} {
    %c0_i32 = arith.constant 0 : i32
    %0 = arith.cmpi eq, %arg1, %c0_i32 : i32
    %1 = arith.extui %0 : i1 to i32
    %c0_i32_0 = arith.constant 0 : i32
    %2 = arith.cmpi ne, %1, %c0_i32_0 : i32
    scf.if %2 {
      %cst_126 = arith.constant 0.000000e+00 : f32
      %387 = vector.broadcast %cst_126 : f32 to vector<8x32xf32>
      %c0_127 = arith.constant 0 : index
      %c0_128 = arith.constant 0 : index
      %388 = vector.load %arg11[%c0_127, %c0_128] : memref<8x32xf32, #tpu.memory_space<vmem>>, vector<8x32xf32>
      tpu.vector_store %arg11[%c0_127, %c0_128], %387 {strides = array<i32>} : memref<8x32xf32, #tpu.memory_space<vmem>>, vector<8x32xf32>,
      %cst_129 = arith.constant 0.000000e+00 : f32
      %389 = vector.broadcast %cst_129 : f32 to vector<8x32xf32>
      %c0_130 = arith.constant 0 : index
      %c0_131 = arith.constant 0 : index
      %390 = vector.load %arg12[%c0_130, %c0_131] : memref<8x32xf32, #tpu.memory_space<vmem>>, vector<8x32xf32>
      tpu.vector_store %arg12[%c0_130, %c0_131], %389 {strides = array<i32>} : memref<8x32xf32, #tpu.memory_space<vmem>>, vector<8x32xf32>,
    } else {
    }
    %c0 = arith.constant 0 : index
    %c0_1 = arith.constant 0 : index
    %c0_2 = arith.constant 0 : index
    %3 = vector.load %arg2[%c0, %c0_1, %c0_2] : memref<1x64x8xf32, #tpu.memory_space<vmem>>, vector<1x64x8xf32>
    %4 = vector.shape_cast %3 : vector<1x64x8xf32> to vector<64x8xf32>
    %c0_3 = arith.constant 0 : index
    %c0_4 = arith.constant 0 : index
    %5 = vector.load %arg4[%c0_3, %c0_4] : memref<8x128xf32, #tpu.memory_space<vmem>>, vector<8x128xf32>
    %cst = arith.constant dense<0.000000e+00> : vector<64x128xf32>
    %6 = tpu.matmul %4, %5, %cst {dimension_numbers = #tpu.dot_dimension_numbers<[1], [0], [0], [1], [0, 0, 1, 1], [], []>} : vector<64x8xf32>, vector<8x128xf32>, vector<64x128xf32> -> vector<64x128xf32>
    %c0_5 = arith.constant 0 : index
    %c0_6 = arith.constant 0 : index
    %7 = vector.load %arg6[%c0_5, %c0_6] : memref<1x128xf32, #tpu.memory_space<vmem>>, vector<1x128xf32>
    %8 = vector.broadcast %7 : vector<1x128xf32> to vector<64x128xf32>
    %9 = arith.addf %6, %8 : vector<64x128xf32>
    %c0_7 = arith.constant 0 : index
    %c0_8 = arith.constant 0 : index
    %10 = vector.load %arg13[%c0_7, %c0_8] : memref<64x128xf32, #tpu.memory_space<vmem>>, vector<64x128xf32>
    tpu.vector_store %arg13[%c0_7, %c0_8], %9 {strides = array<i32>} : memref<64x128xf32, #tpu.memory_space<vmem>>, vector<64x128xf32>,
    %c0_9 = arith.constant 0 : index
    %c0_10 = arith.constant 0 : index
    %11 = vector.load %arg5[%c0_9, %c0_10] : memref<64x160xf32, #tpu.memory_space<vmem>>, vector<64x160xf32>
    %c0_11 = arith.constant 0 : index
    %c0_12 = arith.constant 0 : index
    %12 = vector.load %arg7[%c0_11, %c0_12] : memref<1x32xf32, #tpu.memory_space<vmem>>, vector<1x32xf32>
    %c0_13 = arith.constant 0 : index
    %c0_14 = arith.constant 0 : index
    %13 = vector.load %arg11[%c0_13, %c0_14] : memref<8x32xf32, #tpu.memory_space<vmem>>, vector<8x32xf32>
    %c0_15 = arith.constant 0 : index
    %c0_16 = arith.constant 0 : index
    %14 = vector.load %arg12[%c0_15, %c0_16] : memref<8x32xf32, #tpu.memory_space<vmem>>, vector<8x32xf32>
    %c0_i32_17 = arith.constant 0 : i32
    %c4_i32 = arith.constant 4 : i32
    %15 = arith.muli %c0_i32_17, %c4_i32 : i32
    %c0_i32_18 = arith.constant 0 : i32
    %16 = arith.addi %15, %c0_i32_18 : i32
    %17 = tpu.concatenate %13, %14 in 1 : vector<8x32xf32>, vector<8x32xf32> -> vector<8x64xf32>
    %cst_19 = arith.constant dense<0.000000e+00> : vector<8x160xf32>
    %18 = tpu.matmul %17, %11, %cst_19 {dimension_numbers = #tpu.dot_dimension_numbers<[1], [0], [0], [1], [0, 0, 1, 1], [], []>} : vector<8x64xf32>, vector<64x160xf32>, vector<8x160xf32> -> vector<8x160xf32>
    %19 = arith.index_cast %16 : i32 to index
    %c0_20 = arith.constant 0 : index
    %c0_21 = arith.constant 0 : index
    %20 = vector.load %arg3[%19, %c0_20, %c0_21] : memref<8x8x1xf32, #tpu.memory_space<vmem>>, vector<1x8x1xf32>
    %21 = vector.shape_cast %20 : vector<1x8x1xf32> to vector<8x1xf32>
    %cst_22 = arith.constant 2.71828175 : f32
    %22 = vector.broadcast %cst_22 : f32 to vector<8x1xf32>
    %23 = arith.addf %21, %22 : vector<8x1xf32>
    %24 = math.log %23 : vector<8x1xf32>
    %cst_23 = arith.constant 1.000000e+00 : f32
    %25 = vector.broadcast %cst_23 : f32 to vector<8x1xf32>
    %26 = arith.divf %25, %24 : vector<8x1xf32>
    %27 = vector.extract_strided_slice %18 {offsets = [0, 128], sizes = [8, 32], strides = [1, 1]} : vector<8x160xf32> to vector<8x32xf32>
    %28 = vector.broadcast %12 : vector<1x32xf32> to vector<8x32xf32>
    %29 = arith.addf %27, %28 : vector<8x32xf32>
    %30 = math.tanh %29 : vector<8x32xf32>
    %31 = arith.subf %14, %30 : vector<8x32xf32>
    %32 = vector.broadcast %26 : vector<8x1xf32> to vector<8x32xf32>
    %33 = arith.mulf %32, %30 : vector<8x32xf32>
    %34 = arith.addf %31, %33 : vector<8x32xf32>
    %c8_i32 = arith.constant 8 : i32
    %35 = arith.muli %16, %c8_i32 : i32
    %36 = tpu.assume_multiple %35, 8 : i32
    %37 = arith.index_cast %36 : i32 to index
    %c0_24 = arith.constant 0 : index
    %38 = vector.load %arg13[%37, %c0_24] : memref<64x128xf32, #tpu.memory_space<vmem>>, vector<8x128xf32>
    %39 = vector.extract_strided_slice %18 {offsets = [0, 0], sizes = [8, 128], strides = [1, 1]} : vector<8x160xf32> to vector<8x128xf32>
    %40 = arith.addf %38, %39 : vector<8x128xf32>
    %41 = arith.negf %40 : vector<8x128xf32>
    %42 = math.exp %41 : vector<8x128xf32>
    %cst_25 = arith.constant 1.000000e+00 : f32
    %43 = vector.broadcast %cst_25 : f32 to vector<8x128xf32>
    %44 = arith.addf %43, %42 : vector<8x128xf32>
    %45 = arith.divf %43, %44 : vector<8x128xf32>
    %46 = vector.extract_strided_slice %45 {offsets = [0, 0], sizes = [8, 32], strides = [1, 1]} : vector<8x128xf32> to vector<8x32xf32>
    %47 = vector.extract_strided_slice %45 {offsets = [0, 32], sizes = [8, 32], strides = [1, 1]} : vector<8x128xf32> to vector<8x32xf32>
    %48 = vector.extract_strided_slice %45 {offsets = [0, 64], sizes = [8, 32], strides = [1, 1]} : vector<8x128xf32> to vector<8x32xf32>
    %49 = vector.extract_strided_slice %45 {offsets = [0, 96], sizes = [8, 32], strides = [1, 1]} : vector<8x128xf32> to vector<8x32xf32>
    %50 = arith.mulf %47, %34 : vector<8x32xf32>
    %51 = arith.mulf %46, %49 : vector<8x32xf32>
    %52 = arith.addf %50, %51 : vector<8x32xf32>
    %53 = math.tanh %52 : vector<8x32xf32>
    %54 = arith.mulf %48, %53 : vector<8x32xf32>
    %c8_i32_26 = arith.constant 8 : i32
    %55 = arith.muli %arg1, %c8_i32_26 : i32
    %56 = arith.addi %55, %16 : i32
    %c7_i32 = arith.constant 7 : i32
    %57 = arith.cmpi eq, %56, %c7_i32 : i32
    %58 = arith.extui %57 : i1 to i32
    %c0_i32_27 = arith.constant 0 : i32
    %59 = arith.cmpi ne, %58, %c0_i32_27 : i32
    scf.if %59 {
      %c0_126 = arith.constant 0 : index
      %c0_127 = arith.constant 0 : index
      %387 = vector.load %arg9[%c0_126, %c0_127] : memref<8x32xf32, #tpu.memory_space<vmem>>, vector<8x32xf32>
      tpu.vector_store %arg9[%c0_126, %c0_127], %54 {strides = array<i32>} : memref<8x32xf32, #tpu.memory_space<vmem>>, vector<8x32xf32>,
      %c0_128 = arith.constant 0 : index
      %c0_129 = arith.constant 0 : index
      %388 = vector.load %arg10[%c0_128, %c0_129] : memref<8x32xf32, #tpu.memory_space<vmem>>, vector<8x32xf32>
      tpu.vector_store %arg10[%c0_128, %c0_129], %52 {strides = array<i32>} : memref<8x32xf32, #tpu.memory_space<vmem>>, vector<8x32xf32>,
    } else {
    }
    %c4_i32_28 = arith.constant 4 : i32
    %60 = arith.muli %c0_i32_17, %c4_i32_28 : i32
    %c1_i32 = arith.constant 1 : i32
    %61 = arith.addi %60, %c1_i32 : i32
    %62 = tpu.concatenate %54, %52 in 1 : vector<8x32xf32>, vector<8x32xf32> -> vector<8x64xf32>
    %cst_29 = arith.constant dense<0.000000e+00> : vector<8x160xf32>
    %63 = tpu.matmul %62, %11, %cst_29 {dimension_numbers = #tpu.dot_dimension_numbers<[1], [0], [0], [1], [0, 0, 1, 1], [], []>} : vector<8x64xf32>, vector<64x160xf32>, vector<8x160xf32> -> vector<8x160xf32>
    %64 = arith.index_cast %61 : i32 to index
    %c0_30 = arith.constant 0 : index
    %c0_31 = arith.constant 0 : index
    %65 = vector.load %arg3[%64, %c0_30, %c0_31] : memref<8x8x1xf32, #tpu.memory_space<vmem>>, vector<1x8x1xf32>
    %66 = vector.shape_cast %65 : vector<1x8x1xf32> to vector<8x1xf32>
    %cst_32 = arith.constant 2.71828175 : f32
    %67 = vector.broadcast %cst_32 : f32 to vector<8x1xf32>
    %68 = arith.addf %66, %67 : vector<8x1xf32>
    %69 = math.log %68 : vector<8x1xf32>
    %cst_33 = arith.constant 1.000000e+00 : f32
    %70 = vector.broadcast %cst_33 : f32 to vector<8x1xf32>
    %71 = arith.divf %70, %69 : vector<8x1xf32>
    %72 = vector.extract_strided_slice %63 {offsets = [0, 128], sizes = [8, 32], strides = [1, 1]} : vector<8x160xf32> to vector<8x32xf32>
    %73 = vector.broadcast %12 : vector<1x32xf32> to vector<8x32xf32>
    %74 = arith.addf %72, %73 : vector<8x32xf32>
    %75 = math.tanh %74 : vector<8x32xf32>
    %76 = arith.subf %52, %75 : vector<8x32xf32>
    %77 = vector.broadcast %71 : vector<8x1xf32> to vector<8x32xf32>
    %78 = arith.mulf %77, %75 : vector<8x32xf32>
    %79 = arith.addf %76, %78 : vector<8x32xf32>
    %c8_i32_34 = arith.constant 8 : i32
    %80 = arith.muli %61, %c8_i32_34 : i32
    %81 = tpu.assume_multiple %80, 8 : i32
    %82 = arith.index_cast %81 : i32 to index
    %c0_35 = arith.constant 0 : index
    %83 = vector.load %arg13[%82, %c0_35] : memref<64x128xf32, #tpu.memory_space<vmem>>, vector<8x128xf32>
    %84 = vector.extract_strided_slice %63 {offsets = [0, 0], sizes = [8, 128], strides = [1, 1]} : vector<8x160xf32> to vector<8x128xf32>
    %85 = arith.addf %83, %84 : vector<8x128xf32>
    %86 = arith.negf %85 : vector<8x128xf32>
    %87 = math.exp %86 : vector<8x128xf32>
    %cst_36 = arith.constant 1.000000e+00 : f32
    %88 = vector.broadcast %cst_36 : f32 to vector<8x128xf32>
    %89 = arith.addf %88, %87 : vector<8x128xf32>
    %90 = arith.divf %88, %89 : vector<8x128xf32>
    %91 = vector.extract_strided_slice %90 {offsets = [0, 0], sizes = [8, 32], strides = [1, 1]} : vector<8x128xf32> to vector<8x32xf32>
    %92 = vector.extract_strided_slice %90 {offsets = [0, 32], sizes = [8, 32], strides = [1, 1]} : vector<8x128xf32> to vector<8x32xf32>
    %93 = vector.extract_strided_slice %90 {offsets = [0, 64], sizes = [8, 32], strides = [1, 1]} : vector<8x128xf32> to vector<8x32xf32>
    %94 = vector.extract_strided_slice %90 {offsets = [0, 96], sizes = [8, 32], strides = [1, 1]} : vector<8x128xf32> to vector<8x32xf32>
    %95 = arith.mulf %92, %79 : vector<8x32xf32>
    %96 = arith.mulf %91, %94 : vector<8x32xf32>
    %97 = arith.addf %95, %96 : vector<8x32xf32>
    %98 = math.tanh %97 : vector<8x32xf32>
    %99 = arith.mulf %93, %98 : vector<8x32xf32>
    %c8_i32_37 = arith.constant 8 : i32
    %100 = arith.muli %arg1, %c8_i32_37 : i32
    %101 = arith.addi %100, %61 : i32
    %c7_i32_38 = arith.constant 7 : i32
    %102 = arith.cmpi eq, %101, %c7_i32_38 : i32
    %103 = arith.extui %102 : i1 to i32
    %c0_i32_39 = arith.constant 0 : i32
    %104 = arith.cmpi ne, %103, %c0_i32_39 : i32
    scf.if %104 {
      %c0_126 = arith.constant 0 : index
      %c0_127 = arith.constant 0 : index
      %387 = vector.load %arg9[%c0_126, %c0_127] : memref<8x32xf32, #tpu.memory_space<vmem>>, vector<8x32xf32>
      tpu.vector_store %arg9[%c0_126, %c0_127], %99 {strides = array<i32>} : memref<8x32xf32, #tpu.memory_space<vmem>>, vector<8x32xf32>,
      %c0_128 = arith.constant 0 : index
      %c0_129 = arith.constant 0 : index
      %388 = vector.load %arg10[%c0_128, %c0_129] : memref<8x32xf32, #tpu.memory_space<vmem>>, vector<8x32xf32>
      tpu.vector_store %arg10[%c0_128, %c0_129], %97 {strides = array<i32>} : memref<8x32xf32, #tpu.memory_space<vmem>>, vector<8x32xf32>,
    } else {
    }
    %c4_i32_40 = arith.constant 4 : i32
    %105 = arith.muli %c0_i32_17, %c4_i32_40 : i32
    %c2_i32 = arith.constant 2 : i32
    %106 = arith.addi %105, %c2_i32 : i32
    %107 = tpu.concatenate %99, %97 in 1 : vector<8x32xf32>, vector<8x32xf32> -> vector<8x64xf32>
    %cst_41 = arith.constant dense<0.000000e+00> : vector<8x160xf32>
    %108 = tpu.matmul %107, %11, %cst_41 {dimension_numbers = #tpu.dot_dimension_numbers<[1], [0], [0], [1], [0, 0, 1, 1], [], []>} : vector<8x64xf32>, vector<64x160xf32>, vector<8x160xf32> -> vector<8x160xf32>
    %109 = arith.index_cast %106 : i32 to index
    %c0_42 = arith.constant 0 : index
    %c0_43 = arith.constant 0 : index
    %110 = vector.load %arg3[%109, %c0_42, %c0_43] : memref<8x8x1xf32, #tpu.memory_space<vmem>>, vector<1x8x1xf32>
    %111 = vector.shape_cast %110 : vector<1x8x1xf32> to vector<8x1xf32>
    %cst_44 = arith.constant 2.71828175 : f32
    %112 = vector.broadcast %cst_44 : f32 to vector<8x1xf32>
    %113 = arith.addf %111, %112 : vector<8x1xf32>
    %114 = math.log %113 : vector<8x1xf32>
    %cst_45 = arith.constant 1.000000e+00 : f32
    %115 = vector.broadcast %cst_45 : f32 to vector<8x1xf32>
    %116 = arith.divf %115, %114 : vector<8x1xf32>
    %117 = vector.extract_strided_slice %108 {offsets = [0, 128], sizes = [8, 32], strides = [1, 1]} : vector<8x160xf32> to vector<8x32xf32>
    %118 = vector.broadcast %12 : vector<1x32xf32> to vector<8x32xf32>
    %119 = arith.addf %117, %118 : vector<8x32xf32>
    %120 = math.tanh %119 : vector<8x32xf32>
    %121 = arith.subf %97, %120 : vector<8x32xf32>
    %122 = vector.broadcast %116 : vector<8x1xf32> to vector<8x32xf32>
    %123 = arith.mulf %122, %120 : vector<8x32xf32>
    %124 = arith.addf %121, %123 : vector<8x32xf32>
    %c8_i32_46 = arith.constant 8 : i32
    %125 = arith.muli %106, %c8_i32_46 : i32
    %126 = tpu.assume_multiple %125, 8 : i32
    %127 = arith.index_cast %126 : i32 to index
    %c0_47 = arith.constant 0 : index
    %128 = vector.load %arg13[%127, %c0_47] : memref<64x128xf32, #tpu.memory_space<vmem>>, vector<8x128xf32>
    %129 = vector.extract_strided_slice %108 {offsets = [0, 0], sizes = [8, 128], strides = [1, 1]} : vector<8x160xf32> to vector<8x128xf32>
    %130 = arith.addf %128, %129 : vector<8x128xf32>
    %131 = arith.negf %130 : vector<8x128xf32>
    %132 = math.exp %131 : vector<8x128xf32>
    %cst_48 = arith.constant 1.000000e+00 : f32
    %133 = vector.broadcast %cst_48 : f32 to vector<8x128xf32>
    %134 = arith.addf %133, %132 : vector<8x128xf32>
    %135 = arith.divf %133, %134 : vector<8x128xf32>
    %136 = vector.extract_strided_slice %135 {offsets = [0, 0], sizes = [8, 32], strides = [1, 1]} : vector<8x128xf32> to vector<8x32xf32>
    %137 = vector.extract_strided_slice %135 {offsets = [0, 32], sizes = [8, 32], strides = [1, 1]} : vector<8x128xf32> to vector<8x32xf32>
    %138 = vector.extract_strided_slice %135 {offsets = [0, 64], sizes = [8, 32], strides = [1, 1]} : vector<8x128xf32> to vector<8x32xf32>
    %139 = vector.extract_strided_slice %135 {offsets = [0, 96], sizes = [8, 32], strides = [1, 1]} : vector<8x128xf32> to vector<8x32xf32>
    %140 = arith.mulf %137, %124 : vector<8x32xf32>
    %141 = arith.mulf %136, %139 : vector<8x32xf32>
    %142 = arith.addf %140, %141 : vector<8x32xf32>
    %143 = math.tanh %142 : vector<8x32xf32>
    %144 = arith.mulf %138, %143 : vector<8x32xf32>
    %c8_i32_49 = arith.constant 8 : i32
    %145 = arith.muli %arg1, %c8_i32_49 : i32
    %146 = arith.addi %145, %106 : i32
    %c7_i32_50 = arith.constant 7 : i32
    %147 = arith.cmpi eq, %146, %c7_i32_50 : i32
    %148 = arith.extui %147 : i1 to i32
    %c0_i32_51 = arith.constant 0 : i32
    %149 = arith.cmpi ne, %148, %c0_i32_51 : i32
    scf.if %149 {
      %c0_126 = arith.constant 0 : index
      %c0_127 = arith.constant 0 : index
      %387 = vector.load %arg9[%c0_126, %c0_127] : memref<8x32xf32, #tpu.memory_space<vmem>>, vector<8x32xf32>
      tpu.vector_store %arg9[%c0_126, %c0_127], %144 {strides = array<i32>} : memref<8x32xf32, #tpu.memory_space<vmem>>, vector<8x32xf32>,
      %c0_128 = arith.constant 0 : index
      %c0_129 = arith.constant 0 : index
      %388 = vector.load %arg10[%c0_128, %c0_129] : memref<8x32xf32, #tpu.memory_space<vmem>>, vector<8x32xf32>
      tpu.vector_store %arg10[%c0_128, %c0_129], %142 {strides = array<i32>} : memref<8x32xf32, #tpu.memory_space<vmem>>, vector<8x32xf32>,
    } else {
    }
    %c4_i32_52 = arith.constant 4 : i32
    %150 = arith.muli %c0_i32_17, %c4_i32_52 : i32
    %c3_i32 = arith.constant 3 : i32
    %151 = arith.addi %150, %c3_i32 : i32
    %152 = tpu.concatenate %144, %142 in 1 : vector<8x32xf32>, vector<8x32xf32> -> vector<8x64xf32>
    %cst_53 = arith.constant dense<0.000000e+00> : vector<8x160xf32>
    %153 = tpu.matmul %152, %11, %cst_53 {dimension_numbers = #tpu.dot_dimension_numbers<[1], [0], [0], [1], [0, 0, 1, 1], [], []>} : vector<8x64xf32>, vector<64x160xf32>, vector<8x160xf32> -> vector<8x160xf32>
    %154 = arith.index_cast %151 : i32 to index
    %c0_54 = arith.constant 0 : index
    %c0_55 = arith.constant 0 : index
    %155 = vector.load %arg3[%154, %c0_54, %c0_55] : memref<8x8x1xf32, #tpu.memory_space<vmem>>, vector<1x8x1xf32>
    %156 = vector.shape_cast %155 : vector<1x8x1xf32> to vector<8x1xf32>
    %cst_56 = arith.constant 2.71828175 : f32
    %157 = vector.broadcast %cst_56 : f32 to vector<8x1xf32>
    %158 = arith.addf %156, %157 : vector<8x1xf32>
    %159 = math.log %158 : vector<8x1xf32>
    %cst_57 = arith.constant 1.000000e+00 : f32
    %160 = vector.broadcast %cst_57 : f32 to vector<8x1xf32>
    %161 = arith.divf %160, %159 : vector<8x1xf32>
    %162 = vector.extract_strided_slice %153 {offsets = [0, 128], sizes = [8, 32], strides = [1, 1]} : vector<8x160xf32> to vector<8x32xf32>
    %163 = vector.broadcast %12 : vector<1x32xf32> to vector<8x32xf32>
    %164 = arith.addf %162, %163 : vector<8x32xf32>
    %165 = math.tanh %164 : vector<8x32xf32>
    %166 = arith.subf %142, %165 : vector<8x32xf32>
    %167 = vector.broadcast %161 : vector<8x1xf32> to vector<8x32xf32>
    %168 = arith.mulf %167, %165 : vector<8x32xf32>
    %169 = arith.addf %166, %168 : vector<8x32xf32>
    %c8_i32_58 = arith.constant 8 : i32
    %170 = arith.muli %151, %c8_i32_58 : i32
    %171 = tpu.assume_multiple %170, 8 : i32
    %172 = arith.index_cast %171 : i32 to index
    %c0_59 = arith.constant 0 : index
    %173 = vector.load %arg13[%172, %c0_59] : memref<64x128xf32, #tpu.memory_space<vmem>>, vector<8x128xf32>
    %174 = vector.extract_strided_slice %153 {offsets = [0, 0], sizes = [8, 128], strides = [1, 1]} : vector<8x160xf32> to vector<8x128xf32>
    %175 = arith.addf %173, %174 : vector<8x128xf32>
    %176 = arith.negf %175 : vector<8x128xf32>
    %177 = math.exp %176 : vector<8x128xf32>
    %cst_60 = arith.constant 1.000000e+00 : f32
    %178 = vector.broadcast %cst_60 : f32 to vector<8x128xf32>
    %179 = arith.addf %178, %177 : vector<8x128xf32>
    %180 = arith.divf %178, %179 : vector<8x128xf32>
    %181 = vector.extract_strided_slice %180 {offsets = [0, 0], sizes = [8, 32], strides = [1, 1]} : vector<8x128xf32> to vector<8x32xf32>
    %182 = vector.extract_strided_slice %180 {offsets = [0, 32], sizes = [8, 32], strides = [1, 1]} : vector<8x128xf32> to vector<8x32xf32>
    %183 = vector.extract_strided_slice %180 {offsets = [0, 64], sizes = [8, 32], strides = [1, 1]} : vector<8x128xf32> to vector<8x32xf32>
    %184 = vector.extract_strided_slice %180 {offsets = [0, 96], sizes = [8, 32], strides = [1, 1]} : vector<8x128xf32> to vector<8x32xf32>
    %185 = arith.mulf %182, %169 : vector<8x32xf32>
    %186 = arith.mulf %181, %184 : vector<8x32xf32>
    %187 = arith.addf %185, %186 : vector<8x32xf32>
    %188 = math.tanh %187 : vector<8x32xf32>
    %189 = arith.mulf %183, %188 : vector<8x32xf32>
    %c8_i32_61 = arith.constant 8 : i32
    %190 = arith.muli %arg1, %c8_i32_61 : i32
    %191 = arith.addi %190, %151 : i32
    %c7_i32_62 = arith.constant 7 : i32
    %192 = arith.cmpi eq, %191, %c7_i32_62 : i32
    %193 = arith.extui %192 : i1 to i32
    %c0_i32_63 = arith.constant 0 : i32
    %194 = arith.cmpi ne, %193, %c0_i32_63 : i32
    scf.if %194 {
      %c0_126 = arith.constant 0 : index
      %c0_127 = arith.constant 0 : index
      %387 = vector.load %arg9[%c0_126, %c0_127] : memref<8x32xf32, #tpu.memory_space<vmem>>, vector<8x32xf32>
      tpu.vector_store %arg9[%c0_126, %c0_127], %189 {strides = array<i32>} : memref<8x32xf32, #tpu.memory_space<vmem>>, vector<8x32xf32>,
      %c0_128 = arith.constant 0 : index
      %c0_129 = arith.constant 0 : index
      %388 = vector.load %arg10[%c0_128, %c0_129] : memref<8x32xf32, #tpu.memory_space<vmem>>, vector<8x32xf32>
      tpu.vector_store %arg10[%c0_128, %c0_129], %187 {strides = array<i32>} : memref<8x32xf32, #tpu.memory_space<vmem>>, vector<8x32xf32>,
    } else {
    }
    %195 = tpu.concatenate %54, %99, %144, %189 in 1 : vector<8x32xf32>, vector<8x32xf32>, vector<8x32xf32>, vector<8x32xf32> -> vector<8x128xf32>
    %196 = arith.index_cast %c0_i32_17 : i32 to index
    %c0_64 = arith.constant 0 : index
    %c0_65 = arith.constant 0 : index
    %197 = vector.load %arg8[%196, %c0_64, %c0_65] : memref<2x8x128xf32, #tpu.memory_space<vmem>>, vector<1x8x128xf32>
    %198 = vector.shape_cast %197 : vector<1x8x128xf32> to vector<8x128xf32>
    %199 = vector.shape_cast %195 : vector<8x128xf32> to vector<1x8x128xf32>
    tpu.vector_store %arg8[%196, %c0_64, %c0_65], %199 {strides = array<i32>} : memref<2x8x128xf32, #tpu.memory_space<vmem>>, vector<1x8x128xf32>,
    %c1_i32_66 = arith.constant 1 : i32
    %c4_i32_67 = arith.constant 4 : i32
    %200 = arith.muli %c1_i32_66, %c4_i32_67 : i32
    %c0_i32_68 = arith.constant 0 : i32
    %201 = arith.addi %200, %c0_i32_68 : i32
    %202 = tpu.concatenate %189, %187 in 1 : vector<8x32xf32>, vector<8x32xf32> -> vector<8x64xf32>
    %cst_69 = arith.constant dense<0.000000e+00> : vector<8x160xf32>
    %203 = tpu.matmul %202, %11, %cst_69 {dimension_numbers = #tpu.dot_dimension_numbers<[1], [0], [0], [1], [0, 0, 1, 1], [], []>} : vector<8x64xf32>, vector<64x160xf32>, vector<8x160xf32> -> vector<8x160xf32>
    %204 = arith.index_cast %201 : i32 to index
    %c0_70 = arith.constant 0 : index
    %c0_71 = arith.constant 0 : index
    %205 = vector.load %arg3[%204, %c0_70, %c0_71] : memref<8x8x1xf32, #tpu.memory_space<vmem>>, vector<1x8x1xf32>
    %206 = vector.shape_cast %205 : vector<1x8x1xf32> to vector<8x1xf32>
    %cst_72 = arith.constant 2.71828175 : f32
    %207 = vector.broadcast %cst_72 : f32 to vector<8x1xf32>
    %208 = arith.addf %206, %207 : vector<8x1xf32>
    %209 = math.log %208 : vector<8x1xf32>
    %cst_73 = arith.constant 1.000000e+00 : f32
    %210 = vector.broadcast %cst_73 : f32 to vector<8x1xf32>
    %211 = arith.divf %210, %209 : vector<8x1xf32>
    %212 = vector.extract_strided_slice %203 {offsets = [0, 128], sizes = [8, 32], strides = [1, 1]} : vector<8x160xf32> to vector<8x32xf32>
    %213 = vector.broadcast %12 : vector<1x32xf32> to vector<8x32xf32>
    %214 = arith.addf %212, %213 : vector<8x32xf32>
    %215 = math.tanh %214 : vector<8x32xf32>
    %216 = arith.subf %187, %215 : vector<8x32xf32>
    %217 = vector.broadcast %211 : vector<8x1xf32> to vector<8x32xf32>
    %218 = arith.mulf %217, %215 : vector<8x32xf32>
    %219 = arith.addf %216, %218 : vector<8x32xf32>
    %c8_i32_74 = arith.constant 8 : i32
    %220 = arith.muli %201, %c8_i32_74 : i32
    %221 = tpu.assume_multiple %220, 8 : i32
    %222 = arith.index_cast %221 : i32 to index
    %c0_75 = arith.constant 0 : index
    %223 = vector.load %arg13[%222, %c0_75] : memref<64x128xf32, #tpu.memory_space<vmem>>, vector<8x128xf32>
    %224 = vector.extract_strided_slice %203 {offsets = [0, 0], sizes = [8, 128], strides = [1, 1]} : vector<8x160xf32> to vector<8x128xf32>
    %225 = arith.addf %223, %224 : vector<8x128xf32>
    %226 = arith.negf %225 : vector<8x128xf32>
    %227 = math.exp %226 : vector<8x128xf32>
    %cst_76 = arith.constant 1.000000e+00 : f32
    %228 = vector.broadcast %cst_76 : f32 to vector<8x128xf32>
    %229 = arith.addf %228, %227 : vector<8x128xf32>
    %230 = arith.divf %228, %229 : vector<8x128xf32>
    %231 = vector.extract_strided_slice %230 {offsets = [0, 0], sizes = [8, 32], strides = [1, 1]} : vector<8x128xf32> to vector<8x32xf32>
    %232 = vector.extract_strided_slice %230 {offsets = [0, 32], sizes = [8, 32], strides = [1, 1]} : vector<8x128xf32> to vector<8x32xf32>
    %233 = vector.extract_strided_slice %230 {offsets = [0, 64], sizes = [8, 32], strides = [1, 1]} : vector<8x128xf32> to vector<8x32xf32>
    %234 = vector.extract_strided_slice %230 {offsets = [0, 96], sizes = [8, 32], strides = [1, 1]} : vector<8x128xf32> to vector<8x32xf32>
    %235 = arith.mulf %232, %219 : vector<8x32xf32>
    %236 = arith.mulf %231, %234 : vector<8x32xf32>
    %237 = arith.addf %235, %236 : vector<8x32xf32>
    %238 = math.tanh %237 : vector<8x32xf32>
    %239 = arith.mulf %233, %238 : vector<8x32xf32>
    %c8_i32_77 = arith.constant 8 : i32
    %240 = arith.muli %arg1, %c8_i32_77 : i32
    %241 = arith.addi %240, %201 : i32
    %c7_i32_78 = arith.constant 7 : i32
    %242 = arith.cmpi eq, %241, %c7_i32_78 : i32
    %243 = arith.extui %242 : i1 to i32
    %c0_i32_79 = arith.constant 0 : i32
    %244 = arith.cmpi ne, %243, %c0_i32_79 : i32
    scf.if %244 {
      %c0_126 = arith.constant 0 : index
      %c0_127 = arith.constant 0 : index
      %387 = vector.load %arg9[%c0_126, %c0_127] : memref<8x32xf32, #tpu.memory_space<vmem>>, vector<8x32xf32>
      tpu.vector_store %arg9[%c0_126, %c0_127], %239 {strides = array<i32>} : memref<8x32xf32, #tpu.memory_space<vmem>>, vector<8x32xf32>,
      %c0_128 = arith.constant 0 : index
      %c0_129 = arith.constant 0 : index
      %388 = vector.load %arg10[%c0_128, %c0_129] : memref<8x32xf32, #tpu.memory_space<vmem>>, vector<8x32xf32>
      tpu.vector_store %arg10[%c0_128, %c0_129], %237 {strides = array<i32>} : memref<8x32xf32, #tpu.memory_space<vmem>>, vector<8x32xf32>,
    } else {
    }
    %c4_i32_80 = arith.constant 4 : i32
    %245 = arith.muli %c1_i32_66, %c4_i32_80 : i32
    %c1_i32_81 = arith.constant 1 : i32
    %246 = arith.addi %245, %c1_i32_81 : i32
    %247 = tpu.concatenate %239, %237 in 1 : vector<8x32xf32>, vector<8x32xf32> -> vector<8x64xf32>
    %cst_82 = arith.constant dense<0.000000e+00> : vector<8x160xf32>
    %248 = tpu.matmul %247, %11, %cst_82 {dimension_numbers = #tpu.dot_dimension_numbers<[1], [0], [0], [1], [0, 0, 1, 1], [], []>} : vector<8x64xf32>, vector<64x160xf32>, vector<8x160xf32> -> vector<8x160xf32>
    %249 = arith.index_cast %246 : i32 to index
    %c0_83 = arith.constant 0 : index
    %c0_84 = arith.constant 0 : index
    %250 = vector.load %arg3[%249, %c0_83, %c0_84] : memref<8x8x1xf32, #tpu.memory_space<vmem>>, vector<1x8x1xf32>
    %251 = vector.shape_cast %250 : vector<1x8x1xf32> to vector<8x1xf32>
    %cst_85 = arith.constant 2.71828175 : f32
    %252 = vector.broadcast %cst_85 : f32 to vector<8x1xf32>
    %253 = arith.addf %251, %252 : vector<8x1xf32>
    %254 = math.log %253 : vector<8x1xf32>
    %cst_86 = arith.constant 1.000000e+00 : f32
    %255 = vector.broadcast %cst_86 : f32 to vector<8x1xf32>
    %256 = arith.divf %255, %254 : vector<8x1xf32>
    %257 = vector.extract_strided_slice %248 {offsets = [0, 128], sizes = [8, 32], strides = [1, 1]} : vector<8x160xf32> to vector<8x32xf32>
    %258 = vector.broadcast %12 : vector<1x32xf32> to vector<8x32xf32>
    %259 = arith.addf %257, %258 : vector<8x32xf32>
    %260 = math.tanh %259 : vector<8x32xf32>
    %261 = arith.subf %237, %260 : vector<8x32xf32>
    %262 = vector.broadcast %256 : vector<8x1xf32> to vector<8x32xf32>
    %263 = arith.mulf %262, %260 : vector<8x32xf32>
    %264 = arith.addf %261, %263 : vector<8x32xf32>
    %c8_i32_87 = arith.constant 8 : i32
    %265 = arith.muli %246, %c8_i32_87 : i32
    %266 = tpu.assume_multiple %265, 8 : i32
    %267 = arith.index_cast %266 : i32 to index
    %c0_88 = arith.constant 0 : index
    %268 = vector.load %arg13[%267, %c0_88] : memref<64x128xf32, #tpu.memory_space<vmem>>, vector<8x128xf32>
    %269 = vector.extract_strided_slice %248 {offsets = [0, 0], sizes = [8, 128], strides = [1, 1]} : vector<8x160xf32> to vector<8x128xf32>
    %270 = arith.addf %268, %269 : vector<8x128xf32>
    %271 = arith.negf %270 : vector<8x128xf32>
    %272 = math.exp %271 : vector<8x128xf32>
    %cst_89 = arith.constant 1.000000e+00 : f32
    %273 = vector.broadcast %cst_89 : f32 to vector<8x128xf32>
    %274 = arith.addf %273, %272 : vector<8x128xf32>
    %275 = arith.divf %273, %274 : vector<8x128xf32>
    %276 = vector.extract_strided_slice %275 {offsets = [0, 0], sizes = [8, 32], strides = [1, 1]} : vector<8x128xf32> to vector<8x32xf32>
    %277 = vector.extract_strided_slice %275 {offsets = [0, 32], sizes = [8, 32], strides = [1, 1]} : vector<8x128xf32> to vector<8x32xf32>
    %278 = vector.extract_strided_slice %275 {offsets = [0, 64], sizes = [8, 32], strides = [1, 1]} : vector<8x128xf32> to vector<8x32xf32>
    %279 = vector.extract_strided_slice %275 {offsets = [0, 96], sizes = [8, 32], strides = [1, 1]} : vector<8x128xf32> to vector<8x32xf32>
    %280 = arith.mulf %277, %264 : vector<8x32xf32>
    %281 = arith.mulf %276, %279 : vector<8x32xf32>
    %282 = arith.addf %280, %281 : vector<8x32xf32>
    %283 = math.tanh %282 : vector<8x32xf32>
    %284 = arith.mulf %278, %283 : vector<8x32xf32>
    %c8_i32_90 = arith.constant 8 : i32
    %285 = arith.muli %arg1, %c8_i32_90 : i32
    %286 = arith.addi %285, %246 : i32
    %c7_i32_91 = arith.constant 7 : i32
    %287 = arith.cmpi eq, %286, %c7_i32_91 : i32
    %288 = arith.extui %287 : i1 to i32
    %c0_i32_92 = arith.constant 0 : i32
    %289 = arith.cmpi ne, %288, %c0_i32_92 : i32
    scf.if %289 {
      %c0_126 = arith.constant 0 : index
      %c0_127 = arith.constant 0 : index
      %387 = vector.load %arg9[%c0_126, %c0_127] : memref<8x32xf32, #tpu.memory_space<vmem>>, vector<8x32xf32>
      tpu.vector_store %arg9[%c0_126, %c0_127], %284 {strides = array<i32>} : memref<8x32xf32, #tpu.memory_space<vmem>>, vector<8x32xf32>,
      %c0_128 = arith.constant 0 : index
      %c0_129 = arith.constant 0 : index
      %388 = vector.load %arg10[%c0_128, %c0_129] : memref<8x32xf32, #tpu.memory_space<vmem>>, vector<8x32xf32>
      tpu.vector_store %arg10[%c0_128, %c0_129], %282 {strides = array<i32>} : memref<8x32xf32, #tpu.memory_space<vmem>>, vector<8x32xf32>,
    } else {
    }
    %c4_i32_93 = arith.constant 4 : i32
    %290 = arith.muli %c1_i32_66, %c4_i32_93 : i32
    %c2_i32_94 = arith.constant 2 : i32
    %291 = arith.addi %290, %c2_i32_94 : i32
    %292 = tpu.concatenate %284, %282 in 1 : vector<8x32xf32>, vector<8x32xf32> -> vector<8x64xf32>
    %cst_95 = arith.constant dense<0.000000e+00> : vector<8x160xf32>
    %293 = tpu.matmul %292, %11, %cst_95 {dimension_numbers = #tpu.dot_dimension_numbers<[1], [0], [0], [1], [0, 0, 1, 1], [], []>} : vector<8x64xf32>, vector<64x160xf32>, vector<8x160xf32> -> vector<8x160xf32>
    %294 = arith.index_cast %291 : i32 to index
    %c0_96 = arith.constant 0 : index
    %c0_97 = arith.constant 0 : index
    %295 = vector.load %arg3[%294, %c0_96, %c0_97] : memref<8x8x1xf32, #tpu.memory_space<vmem>>, vector<1x8x1xf32>
    %296 = vector.shape_cast %295 : vector<1x8x1xf32> to vector<8x1xf32>
    %cst_98 = arith.constant 2.71828175 : f32
    %297 = vector.broadcast %cst_98 : f32 to vector<8x1xf32>
    %298 = arith.addf %296, %297 : vector<8x1xf32>
    %299 = math.log %298 : vector<8x1xf32>
    %cst_99 = arith.constant 1.000000e+00 : f32
    %300 = vector.broadcast %cst_99 : f32 to vector<8x1xf32>
    %301 = arith.divf %300, %299 : vector<8x1xf32>
    %302 = vector.extract_strided_slice %293 {offsets = [0, 128], sizes = [8, 32], strides = [1, 1]} : vector<8x160xf32> to vector<8x32xf32>
    %303 = vector.broadcast %12 : vector<1x32xf32> to vector<8x32xf32>
    %304 = arith.addf %302, %303 : vector<8x32xf32>
    %305 = math.tanh %304 : vector<8x32xf32>
    %306 = arith.subf %282, %305 : vector<8x32xf32>
    %307 = vector.broadcast %301 : vector<8x1xf32> to vector<8x32xf32>
    %308 = arith.mulf %307, %305 : vector<8x32xf32>
    %309 = arith.addf %306, %308 : vector<8x32xf32>
    %c8_i32_100 = arith.constant 8 : i32
    %310 = arith.muli %291, %c8_i32_100 : i32
    %311 = tpu.assume_multiple %310, 8 : i32
    %312 = arith.index_cast %311 : i32 to index
    %c0_101 = arith.constant 0 : index
    %313 = vector.load %arg13[%312, %c0_101] : memref<64x128xf32, #tpu.memory_space<vmem>>, vector<8x128xf32>
    %314 = vector.extract_strided_slice %293 {offsets = [0, 0], sizes = [8, 128], strides = [1, 1]} : vector<8x160xf32> to vector<8x128xf32>
    %315 = arith.addf %313, %314 : vector<8x128xf32>
    %316 = arith.negf %315 : vector<8x128xf32>
    %317 = math.exp %316 : vector<8x128xf32>
    %cst_102 = arith.constant 1.000000e+00 : f32
    %318 = vector.broadcast %cst_102 : f32 to vector<8x128xf32>
    %319 = arith.addf %318, %317 : vector<8x128xf32>
    %320 = arith.divf %318, %319 : vector<8x128xf32>
    %321 = vector.extract_strided_slice %320 {offsets = [0, 0], sizes = [8, 32], strides = [1, 1]} : vector<8x128xf32> to vector<8x32xf32>
    %322 = vector.extract_strided_slice %320 {offsets = [0, 32], sizes = [8, 32], strides = [1, 1]} : vector<8x128xf32> to vector<8x32xf32>
    %323 = vector.extract_strided_slice %320 {offsets = [0, 64], sizes = [8, 32], strides = [1, 1]} : vector<8x128xf32> to vector<8x32xf32>
    %324 = vector.extract_strided_slice %320 {offsets = [0, 96], sizes = [8, 32], strides = [1, 1]} : vector<8x128xf32> to vector<8x32xf32>
    %325 = arith.mulf %322, %309 : vector<8x32xf32>
    %326 = arith.mulf %321, %324 : vector<8x32xf32>
    %327 = arith.addf %325, %326 : vector<8x32xf32>
    %328 = math.tanh %327 : vector<8x32xf32>
    %329 = arith.mulf %323, %328 : vector<8x32xf32>
    %c8_i32_103 = arith.constant 8 : i32
    %330 = arith.muli %arg1, %c8_i32_103 : i32
    %331 = arith.addi %330, %291 : i32
    %c7_i32_104 = arith.constant 7 : i32
    %332 = arith.cmpi eq, %331, %c7_i32_104 : i32
    %333 = arith.extui %332 : i1 to i32
    %c0_i32_105 = arith.constant 0 : i32
    %334 = arith.cmpi ne, %333, %c0_i32_105 : i32
    scf.if %334 {
      %c0_126 = arith.constant 0 : index
      %c0_127 = arith.constant 0 : index
      %387 = vector.load %arg9[%c0_126, %c0_127] : memref<8x32xf32, #tpu.memory_space<vmem>>, vector<8x32xf32>
      tpu.vector_store %arg9[%c0_126, %c0_127], %329 {strides = array<i32>} : memref<8x32xf32, #tpu.memory_space<vmem>>, vector<8x32xf32>,
      %c0_128 = arith.constant 0 : index
      %c0_129 = arith.constant 0 : index
      %388 = vector.load %arg10[%c0_128, %c0_129] : memref<8x32xf32, #tpu.memory_space<vmem>>, vector<8x32xf32>
      tpu.vector_store %arg10[%c0_128, %c0_129], %327 {strides = array<i32>} : memref<8x32xf32, #tpu.memory_space<vmem>>, vector<8x32xf32>,
    } else {
    }
    %c4_i32_106 = arith.constant 4 : i32
    %335 = arith.muli %c1_i32_66, %c4_i32_106 : i32
    %c3_i32_107 = arith.constant 3 : i32
    %336 = arith.addi %335, %c3_i32_107 : i32
    %337 = tpu.concatenate %329, %327 in 1 : vector<8x32xf32>, vector<8x32xf32> -> vector<8x64xf32>
    %cst_108 = arith.constant dense<0.000000e+00> : vector<8x160xf32>
    %338 = tpu.matmul %337, %11, %cst_108 {dimension_numbers = #tpu.dot_dimension_numbers<[1], [0], [0], [1], [0, 0, 1, 1], [], []>} : vector<8x64xf32>, vector<64x160xf32>, vector<8x160xf32> -> vector<8x160xf32>
    %339 = arith.index_cast %336 : i32 to index
    %c0_109 = arith.constant 0 : index
    %c0_110 = arith.constant 0 : index
    %340 = vector.load %arg3[%339, %c0_109, %c0_110] : memref<8x8x1xf32, #tpu.memory_space<vmem>>, vector<1x8x1xf32>
    %341 = vector.shape_cast %340 : vector<1x8x1xf32> to vector<8x1xf32>
    %cst_111 = arith.constant 2.71828175 : f32
    %342 = vector.broadcast %cst_111 : f32 to vector<8x1xf32>
    %343 = arith.addf %341, %342 : vector<8x1xf32>
    %344 = math.log %343 : vector<8x1xf32>
    %cst_112 = arith.constant 1.000000e+00 : f32
    %345 = vector.broadcast %cst_112 : f32 to vector<8x1xf32>
    %346 = arith.divf %345, %344 : vector<8x1xf32>
    %347 = vector.extract_strided_slice %338 {offsets = [0, 128], sizes = [8, 32], strides = [1, 1]} : vector<8x160xf32> to vector<8x32xf32>
    %348 = vector.broadcast %12 : vector<1x32xf32> to vector<8x32xf32>
    %349 = arith.addf %347, %348 : vector<8x32xf32>
    %350 = math.tanh %349 : vector<8x32xf32>
    %351 = arith.subf %327, %350 : vector<8x32xf32>
    %352 = vector.broadcast %346 : vector<8x1xf32> to vector<8x32xf32>
    %353 = arith.mulf %352, %350 : vector<8x32xf32>
    %354 = arith.addf %351, %353 : vector<8x32xf32>
    %c8_i32_113 = arith.constant 8 : i32
    %355 = arith.muli %336, %c8_i32_113 : i32
    %356 = tpu.assume_multiple %355, 8 : i32
    %357 = arith.index_cast %356 : i32 to index
    %c0_114 = arith.constant 0 : index
    %358 = vector.load %arg13[%357, %c0_114] : memref<64x128xf32, #tpu.memory_space<vmem>>, vector<8x128xf32>
    %359 = vector.extract_strided_slice %338 {offsets = [0, 0], sizes = [8, 128], strides = [1, 1]} : vector<8x160xf32> to vector<8x128xf32>
    %360 = arith.addf %358, %359 : vector<8x128xf32>
    %361 = arith.negf %360 : vector<8x128xf32>
    %362 = math.exp %361 : vector<8x128xf32>
    %cst_115 = arith.constant 1.000000e+00 : f32
    %363 = vector.broadcast %cst_115 : f32 to vector<8x128xf32>
    %364 = arith.addf %363, %362 : vector<8x128xf32>
    %365 = arith.divf %363, %364 : vector<8x128xf32>
    %366 = vector.extract_strided_slice %365 {offsets = [0, 0], sizes = [8, 32], strides = [1, 1]} : vector<8x128xf32> to vector<8x32xf32>
    %367 = vector.extract_strided_slice %365 {offsets = [0, 32], sizes = [8, 32], strides = [1, 1]} : vector<8x128xf32> to vector<8x32xf32>
    %368 = vector.extract_strided_slice %365 {offsets = [0, 64], sizes = [8, 32], strides = [1, 1]} : vector<8x128xf32> to vector<8x32xf32>
    %369 = vector.extract_strided_slice %365 {offsets = [0, 96], sizes = [8, 32], strides = [1, 1]} : vector<8x128xf32> to vector<8x32xf32>
    %370 = arith.mulf %367, %354 : vector<8x32xf32>
    %371 = arith.mulf %366, %369 : vector<8x32xf32>
    %372 = arith.addf %370, %371 : vector<8x32xf32>
    %373 = math.tanh %372 : vector<8x32xf32>
    %374 = arith.mulf %368, %373 : vector<8x32xf32>
    %c8_i32_116 = arith.constant 8 : i32
    %375 = arith.muli %arg1, %c8_i32_116 : i32
    %376 = arith.addi %375, %336 : i32
    %c7_i32_117 = arith.constant 7 : i32
    %377 = arith.cmpi eq, %376, %c7_i32_117 : i32
    %378 = arith.extui %377 : i1 to i32
    %c0_i32_118 = arith.constant 0 : i32
    %379 = arith.cmpi ne, %378, %c0_i32_118 : i32
    scf.if %379 {
      %c0_126 = arith.constant 0 : index
      %c0_127 = arith.constant 0 : index
      %387 = vector.load %arg9[%c0_126, %c0_127] : memref<8x32xf32, #tpu.memory_space<vmem>>, vector<8x32xf32>
      tpu.vector_store %arg9[%c0_126, %c0_127], %374 {strides = array<i32>} : memref<8x32xf32, #tpu.memory_space<vmem>>, vector<8x32xf32>,
      %c0_128 = arith.constant 0 : index
      %c0_129 = arith.constant 0 : index
      %388 = vector.load %arg10[%c0_128, %c0_129] : memref<8x32xf32, #tpu.memory_space<vmem>>, vector<8x32xf32>
      tpu.vector_store %arg10[%c0_128, %c0_129], %372 {strides = array<i32>} : memref<8x32xf32, #tpu.memory_space<vmem>>, vector<8x32xf32>,
    } else {
    }
    %380 = tpu.concatenate %239, %284, %329, %374 in 1 : vector<8x32xf32>, vector<8x32xf32>, vector<8x32xf32>, vector<8x32xf32> -> vector<8x128xf32>
    %381 = arith.index_cast %c1_i32_66 : i32 to index
    %c0_119 = arith.constant 0 : index
    %c0_120 = arith.constant 0 : index
    %382 = vector.load %arg8[%381, %c0_119, %c0_120] : memref<2x8x128xf32, #tpu.memory_space<vmem>>, vector<1x8x128xf32>
    %383 = vector.shape_cast %382 : vector<1x8x128xf32> to vector<8x128xf32>
    %384 = vector.shape_cast %380 : vector<8x128xf32> to vector<1x8x128xf32>
    tpu.vector_store %arg8[%381, %c0_119, %c0_120], %384 {strides = array<i32>} : memref<2x8x128xf32, #tpu.memory_space<vmem>>, vector<1x8x128xf32>,
    %c2_i32_121 = arith.constant 2 : i32
    %c0_122 = arith.constant 0 : index
    %c0_123 = arith.constant 0 : index
    %385 = vector.load %arg11[%c0_122, %c0_123] : memref<8x32xf32, #tpu.memory_space<vmem>>, vector<8x32xf32>
    tpu.vector_store %arg11[%c0_122, %c0_123], %374 {strides = array<i32>} : memref<8x32xf32, #tpu.memory_space<vmem>>, vector<8x32xf32>,
    %c0_124 = arith.constant 0 : index
    %c0_125 = arith.constant 0 : index
    %386 = vector.load %arg12[%c0_124, %c0_125] : memref<8x32xf32, #tpu.memory_space<vmem>>, vector<8x32xf32>
    tpu.vector_store %arg12[%c0_124, %c0_125], %372 {strides = array<i32>} : memref<8x32xf32, #tpu.memory_space<vmem>>, vector<8x32xf32>,
    return
  }
  func.func @transform_0(%arg0: i32, %arg1: i32) -> (i32, i32, i32) {
    %c0_i32 = arith.constant 0 : i32
    %c0_i32_0 = arith.constant 0 : i32
    return %arg0, %arg1, %c0_i32 : i32, i32, i32
  }
  func.func @transform_1(%arg0: i32, %arg1: i32) -> (i32, i32, i32) {
    %c0_i32 = arith.constant 0 : i32
    %c0_i32_0 = arith.constant 0 : i32
    return %arg1, %arg0, %c0_i32 : i32, i32, i32
  }
  func.func @transform_2(%arg0: i32, %arg1: i32) -> (i32, i32) {
    %c0_i32 = arith.constant 0 : i32
    %c0_i32_0 = arith.constant 0 : i32
    %c0_i32_1 = arith.constant 0 : i32
    return %c0_i32, %c0_i32_0 : i32, i32
  }
  func.func @transform_3(%arg0: i32, %arg1: i32) -> (i32, i32) {
    %c0_i32 = arith.constant 0 : i32
    %c0_i32_0 = arith.constant 0 : i32
    %c0_i32_1 = arith.constant 0 : i32
    return %c0_i32, %c0_i32_0 : i32, i32
  }
  func.func @transform_4(%arg0: i32, %arg1: i32) -> (i32, i32) {
    %c0_i32 = arith.constant 0 : i32
    %c0_i32_0 = arith.constant 0 : i32
    %c0_i32_1 = arith.constant 0 : i32
    return %c0_i32, %c0_i32_0 : i32, i32
  }
  func.func @transform_5(%arg0: i32, %arg1: i32) -> (i32, i32) {
    %c0_i32 = arith.constant 0 : i32
    %c0_i32_0 = arith.constant 0 : i32
    %c0_i32_1 = arith.constant 0 : i32
    return %c0_i32, %c0_i32_0 : i32, i32
  }
  func.func @transform_6(%arg0: i32, %arg1: i32) -> (i32, i32, i32) {
    %c0_i32 = arith.constant 0 : i32
    %c0_i32_0 = arith.constant 0 : i32
    return %arg1, %arg0, %c0_i32 : i32, i32, i32
  }
  func.func @transform_7(%arg0: i32, %arg1: i32) -> (i32, i32) {
    %c0_i32 = arith.constant 0 : i32
    %c0_i32_0 = arith.constant 0 : i32
    return %arg0, %c0_i32 : i32, i32
  }
  func.func @transform_8(%arg0: i32, %arg1: i32) -> (i32, i32) {
    %c0_i32 = arith.constant 0 : i32
    %c0_i32_0 = arith.constant 0 : i32
    return %arg0, %c0_i32 : i32, i32
  }
}

</mosaic_0001>

<llo_original>
// kernel: tpu_custom_call.1
$region0: #{tpu_custom_call.1}
  #allocation0 [shape = 'u32[]', space=smem, size = 0x4, offset = 0x4, fixed_abs, tag = 'smem constant byte address 0x4 - core index']
  #allocation1 [shape = 'u32[72,128]{1,0:T(1,128)}', space=vmem, size = 0x9000, scoped, tag = 'internal scratch']
  #allocation2 [shape = 'f32[8,32]{1,0:T(8,128)}', space=vmem, size = 0x1000, scoped, tag = 'scratch operand']
  #allocation3 [shape = 'f32[8,32]{1,0:T(8,128)}', space=vmem, size = 0x1000, scoped, tag = 'scratch operand']
  #allocation4 [shape = 'f32[64,128]{1,0:T(8,128)}', space=vmem, size = 0x8000, scoped, tag = 'scratch operand']
  %s0 = inlined_call_operand.vmem [shape: f32[2,64,8], index: 0, kind: input, shape index: {}]
  %s1 = inlined_call_operand.vmem [shape: f32[8,16,1], index: 1, kind: input, shape index: {}]
  %s2 = inlined_call_operand.vmem [shape: f32[8,128], index: 2, kind: input, shape index: {}]
  %s3 = inlined_call_operand.vmem [shape: f32[64,160], index: 3, kind: input, shape index: {}]
  %s4 = inlined_call_operand.vmem [shape: f32[1,128], index: 4, kind: input, shape index: {}]
  %s5 = inlined_call_operand.vmem [shape: f32[1,32], index: 5, kind: input, shape index: {}]
  %s6 = inlined_call_operand.hbm [shape: f32[2,16,128], index: 6, kind: output, shape index: {0}]
  %s7 = inlined_call_operand.hbm [shape: f32[16,32], index: 7, kind: output, shape index: {1}]
  %s8 = inlined_call_operand.hbm [shape: f32[16,32], index: 8, kind: output, shape index: {2}]
  %9 = xla_tuple %s6, %s7, %s8
  %s10 = sld [smem:[#allocation0]]
  $region147: #{tpu_custom_call.1} parent=0
    _
  %s12 = ssub.s32 1, %s10
  %s13 = scalar_select 0, %s12, %s10
  $region1: #{tpu_custom_call.1} parent=0
    #allocation5 [shape = 'u8[65536]{0}', space=vmem, size = 0x10000, scoped, tag = 'input window, operand 1']
    #allocation6 [shape = 'u8[16384]{0}', space=vmem, size = 0x4000, scoped, tag = 'output window, operand 0']
    #allocation7 [shape = 's32[2]{0}', space=sflag, size = 0x8, scoped, tag = 'scoped memory for tpu_custom_call.1']
    #allocation8 [shape = 'u8[8192]{0}', space=vmem, size = 0x2000, scoped, tag = 'output window, operand 1']
    #allocation9 [shape = 's32[2]{0}', space=sflag, size = 0x8, scoped, tag = 'scoped memory for tpu_custom_call.1']
    #allocation10 [shape = 'u8[8192]{0}', space=vmem, size = 0x2000, scoped, tag = 'output window, operand 2']
    %14 = vsyncpa [#allocation7], 0
    %s15 = scalar_lea.sflag [#allocation7], 1
    %16 = vsyncpa %s15, 0
    %17 = vsyncpa [#allocation9], 0
    %s18 = scalar_lea.sflag [#allocation9], 1
    %19 = vsyncpa %s18, 0
    loop: start=0, step=1, limit=4
    $region2: #{tpu_custom_call.1} parent=1 // loop_pre_header
      _
    $region3: #{tpu_custom_call.1} parent=1 // loop_header
      %s21 = sphi 0, %s25
      %p22 = scmp.ge.s32.totalorder %s21, 4
      %s28 = sphi 0, %s40
      %s29 = sphi 0, %s36
      %s30 = sphi 0, %s28
      %s31 = sphi 0, %s29
      %s32 = sphi 0, %s30
      %s33 = sphi 0, %s31
      %s45 = sphi 0, %s47
      %s48 = sphi 0, %s45
      %s49 = sphi 0, %s48
      %s65 = sphi 0, %s49
      %s73 = sphi 0, %s75
      %s76 = sphi 0, %s73
      %s77 = sphi 0, %s76
      %s93 = sphi 0, %s77
      %s97 = sphi 0, %s97
      %s99 = sphi 0, %s97
      %s100 = sphi 0, %s99
      %s114 = sphi 0, %s100
      %s118 = sphi 0, %s118
      %s120 = sphi 0, %s118
      %s121 = sphi 0, %s120
      %s135 = sphi 0, %s121
      %s139 = sphi 0, %s139
      %s141 = sphi 0, %s139
      %s142 = sphi 0, %s141
      %s156 = sphi 0, %s142
      %s160 = sphi 0, %s160
      %s162 = sphi 0, %s160
      %s163 = sphi 0, %s162
      %s177 = sphi 0, %s163
      %s185 = sphi 0, %s187
      %s188 = sphi 0, %s185
      %s189 = sphi 0, %s188
      %s205 = sphi 0, %s189
      %s211 = sphi 0, %s213
      %s214 = sphi 0, %s211
      %s215 = sphi 0, %s214
      %s231 = sphi 0, %s215
      %s237 = sphi 0, %s239
      %s240 = sphi 0, %s237
      %s241 = sphi 0, %s240
      %s257 = sphi 0, %s241
    $region4: #{tpu_custom_call.1} parent=1 // loop_header_branch
      %24 = sbr.rel (%p22) target = $region8
    $region5: #{tpu_custom_call.1} parent=1 // loop_body
      %s26 = ssub.s32 %s21, 1
      %s27 = ssub.s32 %s21, 2
      %s34 = sadd.s32 1, %s29
      %p35 = scmp.ge.s32.totalorder %s34, 1
      %s36 = scalar_select %p35, 0, %s34
      %s37 = sadd.s32 1, %s28
      %s38 = scalar_select %p35, %s37, %s28
      %p39 = scmp.ge.s32.totalorder %s38, 2
      %s40 = scalar_select %p39, 0, %s38
      %s41 = ssub.s32 %s28, %s40
      %s42 = ssub.s32 %s29, %s36
      %s43 = sor.u32 %s41, %s42
      %p44 = scmp.eq.s32.totalorder %s43, 0
      %s46 = sadd.s32 %s45, 1
      %s47 = scalar_select %p44, %s45, %s46
      %p50 = pneg %p44
      %p51 = scmp.eq.s32.totalorder %s21, 1
      %p52 = por %p50, %p51
      %p53 = scmp.ne.s32.totalorder %s45, %s48
      %p54 = scmp.eq.s32.totalorder %s21, 0
      %p55 = por %p53, %p54
      %p56 = scmp.ne.s32.totalorder %s45, %s48
      %p57 = scmp.eq.s32.totalorder %s26, 1
      %p58 = por %p56, %p57
      %p59 = scmp.ne.s32.totalorder %s48, %s49
      %p60 = scmp.eq.s32.totalorder %s26, 0
      %p61 = por %p59, %p60
      %p62 = scmp.ne.s32.totalorder %s48, %s49
      %p63 = scmp.eq.s32.totalorder %s27, 1
      %p64 = por %p62, %p63
      %p66 = scmp.ne.s32.totalorder %s49, %s65
      %p67 = scmp.eq.s32.totalorder %s27, 0
      %p68 = por %p66, %p67
      %s69 = ssub.s32 %s29, %s36
      %s70 = ssub.s32 %s28, %s40
      %s71 = sor.u32 %s69, %s70
      %p72 = scmp.eq.s32.totalorder %s71, 0
      %s74 = sadd.s32 %s73, 1
      %s75 = scalar_select %p72, %s73, %s74
      %p78 = pneg %p72
      %p79 = scmp.eq.s32.totalorder %s21, 1
      %p80 = por %p78, %p79
      %p81 = scmp.ne.s32.totalorder %s73, %s76
      %p82 = scmp.eq.s32.totalorder %s21, 0
      %p83 = por %p81, %p82
      %p84 = scmp.ne.s32.totalorder %s73, %s76
      %p85 = scmp.eq.s32.totalorder %s26, 1
      %p86 = por %p84, %p85
      %p87 = scmp.ne.s32.totalorder %s76, %s77
      %p88 = scmp.eq.s32.totalorder %s26, 0
      %p89 = por %p87, %p88
      %p90 = scmp.ne.s32.totalorder %s76, %s77
      %p91 = scmp.eq.s32.totalorder %s27, 1
      %p92 = por %p90, %p91
      %p94 = scmp.ne.s32.totalorder %s77, %s93
      %p95 = scmp.eq.s32.totalorder %s27, 0
      %p96 = por %p94, %p95
      %s98 = sadd.s32 %s97, 1
      %p101 = scmp.eq.s32.totalorder %s21, 1
      %p102 = scmp.ne.s32.totalorder %s97, %s99
      %p103 = scmp.eq.s32.totalorder %s21, 0
      %p104 = por %p102, %p103
      %p105 = scmp.ne.s32.totalorder %s97, %s99
      %p106 = scmp.eq.s32.totalorder %s26, 1
      %p107 = por %p105, %p106
      %p108 = scmp.ne.s32.totalorder %s99, %s100
      %p109 = scmp.eq.s32.totalorder %s26, 0
      %p110 = por %p108, %p109
      %p111 = scmp.ne.s32.totalorder %s99, %s100
      %p112 = scmp.eq.s32.totalorder %s27, 1
      %p113 = por %p111, %p112
      %p115 = scmp.ne.s32.totalorder %s100, %s114
      %p116 = scmp.eq.s32.totalorder %s27, 0
      %p117 = por %p115, %p116
      %s119 = sadd.s32 %s118, 1
      %p122 = scmp.eq.s32.totalorder %s21, 1
      %p123 = scmp.ne.s32.totalorder %s118, %s120
      %p124 = scmp.eq.s32.totalorder %s21, 0
      %p125 = por %p123, %p124
      %p126 = scmp.ne.s32.totalorder %s118, %s120
      %p127 = scmp.eq.s32.totalorder %s26, 1
      %p128 = por %p126, %p127
      %p129 = scmp.ne.s32.totalorder %s120, %s121
      %p130 = scmp.eq.s32.totalorder %s26, 0
      %p131 = por %p129, %p130
      %p132 = scmp.ne.s32.totalorder %s120, %s121
      %p133 = scmp.eq.s32.totalorder %s27, 1
      %p134 = por %p132, %p133
      %p136 = scmp.ne.s32.totalorder %s121, %s135
      %p137 = scmp.eq.s32.totalorder %s27, 0
      %p138 = por %p136, %p137
      %s140 = sadd.s32 %s139, 1
      %p143 = scmp.eq.s32.totalorder %s21, 1
      %p144 = scmp.ne.s32.totalorder %s139, %s141
      %p145 = scmp.eq.s32.totalorder %s21, 0
      %p146 = por %p144, %p145
      %p147 = scmp.ne.s32.totalorder %s139, %s141
      %p148 = scmp.eq.s32.totalorder %s26, 1
      %p149 = por %p147, %p148
      %p150 = scmp.ne.s32.totalorder %s141, %s142
      %p151 = scmp.eq.s32.totalorder %s26, 0
      %p152 = por %p150, %p151
      %p153 = scmp.ne.s32.totalorder %s141, %s142
      %p154 = scmp.eq.s32.totalorder %s27, 1
      %p155 = por %p153, %p154
      %p157 = scmp.ne.s32.totalorder %s142, %s156
      %p158 = scmp.eq.s32.totalorder %s27, 0
      %p159 = por %p157, %p158
      %s161 = sadd.s32 %s160, 1
      %p164 = scmp.eq.s32.totalorder %s21, 1
      %p165 = scmp.ne.s32.totalorder %s160, %s162
      %p166 = scmp.eq.s32.totalorder %s21, 0
      %p167 = por %p165, %p166
      %p168 = scmp.ne.s32.totalorder %s160, %s162
      %p169 = scmp.eq.s32.totalorder %s26, 1
      %p170 = por %p168, %p169
      %p171 = scmp.ne.s32.totalorder %s162, %s163
      %p172 = scmp.eq.s32.totalorder %s26, 0
      %p173 = por %p171, %p172
      %p174 = scmp.ne.s32.totalorder %s162, %s163
      %p175 = scmp.eq.s32.totalorder %s27, 1
      %p176 = por %p174, %p175
      %p178 = scmp.ne.s32.totalorder %s163, %s177
      %p179 = scmp.eq.s32.totalorder %s27, 0
      %p180 = por %p178, %p179
      %s181 = ssub.s32 %s29, %s36
      %s182 = ssub.s32 %s28, %s40
      %s183 = sor.u32 %s181, %s182
      %p184 = scmp.eq.s32.totalorder %s183, 0
      %s186 = sadd.s32 %s185, 1
      %s187 = scalar_select %p184, %s185, %s186
      %p190 = pneg %p184
      %p191 = scmp.eq.s32.totalorder %s21, 1
      %p192 = por %p190, %p191
      %p193 = scmp.ne.s32.totalorder %s185, %s188
      %p194 = scmp.eq.s32.totalorder %s21, 0
      %p195 = por %p193, %p194
      %p196 = scmp.ne.s32.totalorder %s185, %s188
      %p197 = scmp.eq.s32.totalorder %s26, 1
      %p198 = por %p196, %p197
      %p199 = scmp.ne.s32.totalorder %s188, %s189
      %p200 = scmp.eq.s32.totalorder %s26, 0
      %p201 = por %p199, %p200
      %p202 = scmp.ne.s32.totalorder %s188, %s189
      %p203 = scmp.eq.s32.totalorder %s27, 1
      %p204 = por %p202, %p203
      %p206 = scmp.ne.s32.totalorder %s189, %s205
      %p207 = scmp.eq.s32.totalorder %s27, 0
      %p208 = por %p206, %p207
      %s209 = ssub.s32 %s28, %s40
      %p210 = scmp.eq.s32.totalorder %s209, 0
      %s212 = sadd.s32 %s211, 1
      %s213 = scalar_select %p210, %s211, %s212
      %p216 = pneg %p210
      %p217 = scmp.eq.s32.totalorder %s21, 1
      %p218 = por %p216, %p217
      %p219 = scmp.ne.s32.totalorder %s211, %s214
      %p220 = scmp.eq.s32.totalorder %s21, 0
      %p221 = por %p219, %p220
      %p222 = scmp.ne.s32.totalorder %s211, %s214
      %p223 = scmp.eq.s32.totalorder %s26, 1
      %p224 = por %p222, %p223
      %p225 = scmp.ne.s32.totalorder %s214, %s215
      %p226 = scmp.eq.s32.totalorder %s26, 0
      %p227 = por %p225, %p226
      %p228 = scmp.ne.s32.totalorder %s214, %s215
      %p229 = scmp.eq.s32.totalorder %s27, 1
      %p230 = por %p228, %p229
      %p232 = scmp.ne.s32.totalorder %s215, %s231
      %p233 = scmp.eq.s32.totalorder %s27, 0
      %p234 = por %p232, %p233
      %s235 = ssub.s32 %s28, %s40
      %p236 = scmp.eq.s32.totalorder %s235, 0
      %s238 = sadd.s32 %s237, 1
      %s239 = scalar_select %p236, %s237, %s238
      %p242 = pneg %p236
      %p243 = scmp.eq.s32.totalorder %s21, 1
      %p244 = por %p242, %p243
      %p245 = scmp.ne.s32.totalorder %s237, %s240
      %p246 = scmp.eq.s32.totalorder %s21, 0
      %p247 = por %p245, %p246
      %p248 = scmp.ne.s32.totalorder %s237, %s240
      %p249 = scmp.eq.s32.totalorder %s26, 1
      %p250 = por %p248, %p249
      %p251 = scmp.ne.s32.totalorder %s240, %s241
      %p252 = scmp.eq.s32.totalorder %s26, 0
      %p253 = por %p251, %p252
      %p254 = scmp.ne.s32.totalorder %s240, %s241
      %p255 = scmp.eq.s32.totalorder %s27, 1
      %p256 = por %p254, %p255
      %p258 = scmp.ne.s32.totalorder %s241, %s257
      %p259 = scmp.eq.s32.totalorder %s27, 0
      %p260 = por %p258, %p259
      %p261 = scmp.le.s32.totalorder 1, %s21
      %p262 = scmp.lt.s32.totalorder %s21, 3
      %p263 = pnand %p261, %p262
      %p264 = pneg %p263
      // Predicated region
      $region9: #{tpu_custom_call.1} parent=5 // pred_check
        _
      $region10: #{tpu_custom_call.1} parent=5 // pred_check_branch
        %266 = sbr.rel (%p263) target = $region12
      $region11: #{tpu_custom_call.1} parent=5 // pred_region
        %s267 = ssub.s32 %s21, 1
        // Predicated region
        $region13: #{tpu_custom_call.1} parent=11 // pred_check
          %p268 = pneg %p110
        $region14: #{tpu_custom_call.1} parent=11 // pred_check_branch
          %270 = sbr.rel (%p268) target = $region16
        $region15: #{tpu_custom_call.1} parent=11 // pred_region
          _
        $region16: #{tpu_custom_call.1} parent=11 // pred_fallthru
          _
        // Predicated region
        $region17: #{tpu_custom_call.1} parent=11 // pred_check
          %p271 = pneg %p131
        $region18: #{tpu_custom_call.1} parent=11 // pred_check_branch
          %273 = sbr.rel (%p271) target = $region20
        $region19: #{tpu_custom_call.1} parent=11 // pred_region
          _
        $region20: #{tpu_custom_call.1} parent=11 // pred_fallthru
          _
        // Predicated region
        $region21: #{tpu_custom_call.1} parent=11 // pred_check
          %p274 = pneg %p152
        $region22: #{tpu_custom_call.1} parent=11 // pred_check_branch
          %276 = sbr.rel (%p274) target = $region24
        $region23: #{tpu_custom_call.1} parent=11 // pred_region
          _
        $region24: #{tpu_custom_call.1} parent=11 // pred_fallthru
          _
        // Predicated region
        $region25: #{tpu_custom_call.1} parent=11 // pred_check
          %p277 = pneg %p173
        $region26: #{tpu_custom_call.1} parent=11 // pred_check_branch
          %279 = sbr.rel (%p277) target = $region28
        $region27: #{tpu_custom_call.1} parent=11 // pred_region
          _
        $region28: #{tpu_custom_call.1} parent=11 // pred_fallthru
          _
      $region12: #{tpu_custom_call.1} parent=5 // pred_fallthru
        _
      %p280 = scmp.lt.s32.totalorder %s21, 2
      // Predicated region
      $region29: #{tpu_custom_call.1} parent=5 // pred_check
        %p281 = pneg %p280
      $region30: #{tpu_custom_call.1} parent=5 // pred_check_branch
        %283 = sbr.rel (%p281) target = $region32
      $region31: #{tpu_custom_call.1} parent=5 // pred_region
        // Predicated region
        $region33: #{tpu_custom_call.1} parent=31 // pred_check
          %p284 = pneg %p55
        $region34: #{tpu_custom_call.1} parent=31 // pred_check_branch
          %286 = sbr.rel (%p284) target = $region36
        $region35: #{tpu_custom_call.1} parent=31 // pred_region
          %s287 = smul.u32 8, %s29
          %p288 = scmp.lt.s32.totalorder %s28, 1
          %s289 = scalar_select %p288, %s28, 1
          %p290 = scmp.lt.s32.totalorder %s287, 7
          %s291 = scalar_select %p290, %s287, 7
          %s292 = smul.addr %s289, 8
          %s293 = sadd.s32 %s291, %s292
          %s294 = smul.addr %s293, 8
          %s295 = scalar_lea.vmem %s0, %s294
          %s296 = smul.u32 8, %s29
        $region36: #{tpu_custom_call.1} parent=31 // pred_fallthru
          _
        // Predicated region
        $region37: #{tpu_custom_call.1} parent=31 // pred_check
          %p297 = pneg %p83
        $region38: #{tpu_custom_call.1} parent=31 // pred_check_branch
          %299 = sbr.rel (%p297) target = $region40
        $region39: #{tpu_custom_call.1} parent=31 // pred_region
          %s300 = sand.u32 %s73, 1
          %s301 = sand.u32 %s73, 1
          %s302 = smul.addr %s301, 64
          %s303 = scalar_lea.vmem [#allocation5], %s302
          %s304 = smul.u32 8, %s29
          %s305 = smul.addr %s304, 2
          %s306 = sadd.s32 %s28, %s305
          %s307 = smul.addr %s306, 8
          %s308 = scalar_lea.vmem %s1, %s307
          // Predicated region
          $region41: #{tpu_custom_call.1} parent=39 // pred_check
            _
          $region42: #{tpu_custom_call.1} parent=39 // pred_check_branch
            %310 = sbr.rel (0) target = $region44
          $region43: #{tpu_custom_call.1} parent=39 // pred_region
            // Predicated region
            $region45: #{tpu_custom_call.1} parent=43 // pred_check
              _
            $region46: #{tpu_custom_call.1} parent=43 // pred_check_branch
              %312 = sbr.rel (0) target = $region48
            $region47: #{tpu_custom_call.1} parent=43 // pred_region
              // Predicated region
              $region60: #{tpu_custom_call.1} parent=47 // pred_check
                _
              $region61: #{tpu_custom_call.1} parent=47 // pred_check_branch
                %342 = sbr.rel (0) target = $region63
              $region62: #{tpu_custom_call.1} parent=47 // pred_region
                loop: start=0, step=1, limit=1
                $region64: #{tpu_custom_call.1} parent=62 // loop_pre_header
                  _
                $region65: #{tpu_custom_call.1} parent=62 // loop_header
                  %s344 = sphi 0, %s348
                  %p345 = scmp.ge.s32.totalorder %s344, 1
                  %s349 = sphi %s308, %s308
                  %s350 = sphi %s303, %s303
                $region66: #{tpu_custom_call.1} parent=62 // loop_header_branch
                  %347 = sbr.rel (%p345) target = $region70
                $region67: #{tpu_custom_call.1} parent=62 // loop_body
                  %v351 = vld [vmem:[%s349] sm:$0xff]
                  %352 = vst [vmem:[%s350] sm:$0xff] %v351
                  %v353 = vld [vmem:[%s349 + $0x10] sm:$0xff]
                  %354 = vst [vmem:[%s350 + $0x8] sm:$0xff] %v353
                  %v355 = vld [vmem:[%s349 + $0x20] sm:$0xff]
                  %356 = vst [vmem:[%s350 + $0x10] sm:$0xff] %v355
                  %v357 = vld [vmem:[%s349 + $0x30] sm:$0xff]
                  %358 = vst [vmem:[%s350 + $0x18] sm:$0xff] %v357
                  %v359 = vld [vmem:[%s349 + $0x40] sm:$0xff]
                  %360 = vst [vmem:[%s350 + $0x20] sm:$0xff] %v359
                  %v361 = vld [vmem:[%s349 + $0x50] sm:$0xff]
                  %362 = vst [vmem:[%s350 + $0x28] sm:$0xff] %v361
                  %v363 = vld [vmem:[%s349 + $0x60] sm:$0xff]
                  %364 = vst [vmem:[%s350 + $0x30] sm:$0xff] %v363
                  %v365 = vld [vmem:[%s349 + $0x70] sm:$0xff]
                  %366 = vst [vmem:[%s350 + $0x38] sm:$0xff] %v365
                $region68: #{tpu_custom_call.1} parent=62 // loop_footer
                  %s348 = sadd.s32 1, %s344
                $region69: #{tpu_custom_call.1} parent=62 // loop_footer_branch
                  %343 = sbr.rel target = $region65
                $region70: #{tpu_custom_call.1} parent=62 // loop_exit
                  _
              $region63: #{tpu_custom_call.1} parent=47 // pred_fallthru
                _
              // Predicated region
              $region71: #{tpu_custom_call.1} parent=47 // pred_check
                _
              $region72: #{tpu_custom_call.1} parent=47 // pred_check_branch
                %368 = sbr.rel target = $region74
              $region73: #{tpu_custom_call.1} parent=47 // pred_region
                _
              $region74: #{tpu_custom_call.1} parent=47 // pred_fallthru
                _
            $region48: #{tpu_custom_call.1} parent=43 // pred_fallthru
              _
            // Predicated region
            $region49: #{tpu_custom_call.1} parent=43 // pred_check
              _
            $region50: #{tpu_custom_call.1} parent=43 // pred_check_branch
              %314 = sbr.rel target = $region52
            $region51: #{tpu_custom_call.1} parent=43 // pred_region
              %s316 = ssub.s32 256, 1
              loop: start=0, step=1, limit=1
              $region53: #{tpu_custom_call.1} parent=51 // loop_pre_header
                _
              $region54: #{tpu_custom_call.1} parent=51 // loop_header
                %s318 = sphi 0, %s322
                %p319 = scmp.ge.s32.totalorder %s318, 1
                %s323 = sphi %s308, %s308
                %s324 = sphi %s303, %s303
              $region55: #{tpu_custom_call.1} parent=51 // loop_header_branch
                %321 = sbr.rel (%p319) target = $region59
              $region56: #{tpu_custom_call.1} parent=51 // loop_body
                %v325 = vld [vmem:[%s323] sm:%s316]
                %326 = vst [vmem:[%s324] sm:%s316] %v325
                %v327 = vld [vmem:[%s323 + $0x10] sm:%s316]
                %328 = vst [vmem:[%s324 + $0x8] sm:%s316] %v327
                %v329 = vld [vmem:[%s323 + $0x20] sm:%s316]
                %330 = vst [vmem:[%s324 + $0x10] sm:%s316] %v329
                %v331 = vld [vmem:[%s323 + $0x30] sm:%s316]
                %332 = vst [vmem:[%s324 + $0x18] sm:%s316] %v331
                %v333 = vld [vmem:[%s323 + $0x40] sm:%s316]
                %334 = vst [vmem:[%s324 + $0x20] sm:%s316] %v333
                %v335 = vld [vmem:[%s323 + $0x50] sm:%s316]
                %336 = vst [vmem:[%s324 + $0x28] sm:%s316] %v335
                %v337 = vld [vmem:[%s323 + $0x60] sm:%s316]
                %338 = vst [vmem:[%s324 + $0x30] sm:%s316] %v337
                %v339 = vld [vmem:[%s323 + $0x70] sm:%s316]
                %340 = vst [vmem:[%s324 + $0x38] sm:%s316] %v339
              $region57: #{tpu_custom_call.1} parent=51 // loop_footer
                %s322 = sadd.s32 1, %s318
              $region58: #{tpu_custom_call.1} parent=51 // loop_footer_branch
                %317 = sbr.rel target = $region54
              $region59: #{tpu_custom_call.1} parent=51 // loop_exit
                _
            $region52: #{tpu_custom_call.1} parent=43 // pred_fallthru
              _
          $region44: #{tpu_custom_call.1} parent=39 // pred_fallthru
            _
          %369 = vnop
        $region40: #{tpu_custom_call.1} parent=31 // pred_fallthru
          _
      $region32: #{tpu_custom_call.1} parent=5 // pred_fallthru
        _
      %p370 = scmp.le.s32.totalorder 1, %s21
      %p371 = scmp.lt.s32.totalorder %s21, 3
      %p372 = pnand %p370, %p371
      %p373 = pneg %p372
      // Predicated region
      $region75: #{tpu_custom_call.1} parent=5 // pred_check
        _
      $region76: #{tpu_custom_call.1} parent=5 // pred_check_branch
        %375 = sbr.rel (%p372) target = $region78
      $region77: #{tpu_custom_call.1} parent=5 // pred_region
        %s376 = ssub.s32 %s21, 1
        %s377 = sand.u32 %s76, 1
        %s378 = sand.u32 %s76, 1
        %s379 = smul.addr %s378, 64
        %s380 = scalar_lea.vmem [#allocation5], %s379
        // Predicated region
        $region79: #{tpu_custom_call.1} parent=77 // pred_check
          %p381 = pneg %p89
        $region80: #{tpu_custom_call.1} parent=77 // pred_check_branch
          %383 = sbr.rel (%p381) target = $region82
        $region81: #{tpu_custom_call.1} parent=77 // pred_region
          _
        $region82: #{tpu_custom_call.1} parent=77 // pred_fallthru
          _
        %s384 = smul.u32 8, %s31
        %p385 = scmp.lt.s32.totalorder %s30, 1
        %s386 = scalar_select %p385, %s30, 1
        %p387 = scmp.lt.s32.totalorder %s384, 7
        %s388 = scalar_select %p387, %s384, 7
        %s389 = smul.addr %s386, 8
        %s390 = sadd.s32 %s388, %s389
        %s391 = smul.addr %s390, 8
        %s392 = scalar_lea.vmem %s0, %s391
        %p393 = pneg %p61
        %p394 = pneg %p58
        %s395 = sand.u32 %s76, 1
        %s396 = sand.u32 %s76, 1
        %s397 = smul.addr %s396, 64
        %s398 = scalar_lea.vmem [#allocation5], %s397
        %p399 = pneg %p89
        %p400 = pneg %p86
        %p401 = pneg %p110
        %p402 = pneg %p107
        %p403 = pneg %p131
        %p404 = pneg %p128
        %p405 = pneg %p152
        %p406 = pneg %p149
        %p407 = pneg %p173
        %p408 = pneg %p170
        %p409 = pneg %p201
        %p410 = pneg %p198
        %s411 = sand.u32 %s188, 1
        %s412 = scalar_lea.sflag [#allocation7], %s411
        %s413 = sand.u32 %s188, 1
        %s414 = smul.addr %s413, 16
        %s415 = scalar_lea.vmem [#allocation6], %s414
        %p416 = pneg %p227
        %p417 = pneg %p224
        %s418 = sand.u32 %s26, 1
        %s419 = scalar_lea.sflag [#allocation9], %s418
        %s420 = sand.u32 %s214, 1
        %s421 = smul.addr %s420, 8
        %s422 = scalar_lea.vmem [#allocation8], %s421
        %p423 = pneg %p253
        %p424 = pneg %p250
        %s425 = sand.u32 %s26, 1
        %s426 = scalar_lea.sflag [#allocation9], %s425
        %s427 = sand.u32 %s240, 1
        %s428 = smul.addr %s427, 8
        %s429 = scalar_lea.vmem [#allocation10], %s428
        %s430 = smul.u32 8, %s31
        %p431 = scmp.lt.s32.totalorder %s30, 1
        %s432 = scalar_select %p431, %s30, 1
        %p433 = scmp.lt.s32.totalorder %s430, 7
        %s434 = scalar_select %p433, %s430, 7
        %s435 = smul.addr %s432, 8
        %s436 = sadd.s32 %s434, %s435
        %s437 = smul.addr %s436, 8
        %s438 = scalar_lea.vmem %s0, %s437
        %s439 = smul.u32 8, %s31
        %s440 = smul.u32 8, %s31
        %s441 = smul.u32 2, %s31
        %p442 = scmp.eq.s32.totalorder %s31, 0
        // Predicated region
        $region83: #{tpu_custom_call.1} parent=77 // pred_check
          %p443 = pneg %p442
        $region84: #{tpu_custom_call.1} parent=77 // pred_check_branch
          %445 = sbr.rel (%p443) target = $region86
        $region85: #{tpu_custom_call.1} parent=77 // pred_region
          %vm446 = vcmask 261120
          %447 = vst.msk [vmem:[#allocation2] sm:$0xff] %vm446, 0.0
          %448 = vst.msk [vmem:[#allocation3] sm:$0xff] %vm446, 0.0
        $region86: #{tpu_custom_call.1} parent=77 // pred_fallthru
          _
        %v449 = vld [vmem:[%s438] sm:$0xff]
        %v450 = vld [vmem:[%s438 + $0x8] sm:$0xff]
        %v451 = vld [vmem:[%s438 + $0x10] sm:$0xff]
        %v452 = vld [vmem:[%s438 + $0x18] sm:$0xff]
        %v453 = vld [vmem:[%s438 + $0x20] sm:$0xff]
        %v454 = vld [vmem:[%s438 + $0x28] sm:$0xff]
        %v455 = vld [vmem:[%s438 + $0x30] sm:$0xff]
        %v456 = vld [vmem:[%s438 + $0x38] sm:$0xff]
        %v457 = vld [vmem:[%s2] sm:$0xff]
        %v458 = vld [vmem:[%s4] sm:$0x1]
        %v460 = vperm.slane %v458, 0
        %vm462 = vcmask 64512
        %v464 = vsel %vm462, %v449, 0
        %v467 = vsel %vm462, %v450, 0
        %v470 = vsel %vm462, %v451, 0
        %v473 = vsel %vm462, %v452, 0
        %v476 = vsel %vm462, %v453, 0
        %v479 = vsel %vm462, %v454, 0
        %v482 = vsel %vm462, %v455, 0
        %v485 = vsel %vm462, %v456, 0
        %487 = vmatpush.msra.mxu0 0.0
        %488 = vmatpush.msra.mxu0 0.0
        %489 = vmatpush.msra.mxu0 0.0
        %490 = vmatpush.msra.mxu0 0.0
        %491 = vmatpush.msra.mxu0 0.0
        %492 = vmatpush.msra.mxu0 0.0
        %493 = vmatpush.msra.mxu0 0.0
        %494 = vmatpush.msra.mxu0 0.0
        %495 = vmatpush.msra.mxu0 0.0
        %496 = vmatpush.msra.mxu0 0.0
        %497 = vmatpush.msra.mxu0 0.0
        %498 = vmatpush.msra.mxu0 0.0
        %499 = vmatpush.msra.mxu0 0.0
        %500 = vmatpush.msra.mxu0 0.0
        %501 = vmatpush.msra.mxu0 0.0
        %502 = vmatpush.msra.mxu0 %v457
        %503 = vmatmul.f32.gmra.mxu0 %v464
        %v504 = vpop.f32.mrf.mxu0
        %v505 = vadd.f32 %v460, %v504
        %506 = vmatmul.f32.gmra.mxu0 %v467
        %v507 = vpop.f32.mrf.mxu0
        %v508 = vadd.f32 %v460, %v507
        %509 = vmatmul.f32.gmra.mxu0 %v470
        %v510 = vpop.f32.mrf.mxu0
        %v511 = vadd.f32 %v460, %v510
        %512 = vmatmul.f32.gmra.mxu0 %v473
        %v513 = vpop.f32.mrf.mxu0
        %v514 = vadd.f32 %v460, %v513
        %515 = vmatmul.f32.gmra.mxu0 %v476
        %v516 = vpop.f32.mrf.mxu0
        %v517 = vadd.f32 %v460, %v516
        %518 = vmatmul.f32.gmra.mxu0 %v479
        %v519 = vpop.f32.mrf.mxu0
        %v520 = vadd.f32 %v460, %v519
        %521 = vmatmul.f32.gmra.mxu0 %v482
        %v522 = vpop.f32.mrf.mxu0
        %v523 = vadd.f32 %v460, %v522
        %524 = vmatmul.f32.gmra.mxu0 %v485
        %v525 = vpop.f32.mrf.mxu0
        %v526 = vadd.f32 %v460, %v525
        %527 = vdwg.mxu0
        %528 = vst [vmem:[#allocation4] sm:$0xff] %v505
        %529 = vst [vmem:[#allocation4 + $0x8] sm:$0xff] %v508
        %530 = vst [vmem:[#allocation4 + $0x10] sm:$0xff] %v511
        %531 = vst [vmem:[#allocation4 + $0x18] sm:$0xff] %v514
        %532 = vst [vmem:[#allocation4 + $0x20] sm:$0xff] %v517
        %533 = vst [vmem:[#allocation4 + $0x28] sm:$0xff] %v520
        %534 = vst [vmem:[#allocation4 + $0x30] sm:$0xff] %v523
        %535 = vst [vmem:[#allocation4 + $0x38] sm:$0xff] %v526
        %v536 = vld [vmem:[%s3] sm:$0xff]
        %v537 = vld [vmem:[%s3 + $0x8] sm:$0xff]
        %v538 = vld [vmem:[%s3 + $0x10] sm:$0xff]
        %v539 = vld [vmem:[%s3 + $0x18] sm:$0xff]
        %v540 = vld [vmem:[%s3 + $0x20] sm:$0xff]
        %v541 = vld [vmem:[%s3 + $0x28] sm:$0xff]
        %v542 = vld [vmem:[%s3 + $0x30] sm:$0xff]
        %v543 = vld [vmem:[%s3 + $0x38] sm:$0xff]
        %v544 = vld [vmem:[%s3 + $0x40] sm:$0xff]
        %v545 = vld [vmem:[%s3 + $0x48] sm:$0xff]
        %v546 = vld [vmem:[%s3 + $0x50] sm:$0xff]
        %v547 = vld [vmem:[%s3 + $0x58] sm:$0xff]
        %v548 = vld [vmem:[%s3 + $0x60] sm:$0xff]
        %v549 = vld [vmem:[%s3 + $0x68] sm:$0xff]
        %v550 = vld [vmem:[%s3 + $0x70] sm:$0xff]
        %v551 = vld [vmem:[%s3 + $0x78] sm:$0xff]
        %v552 = vld [vmem:[%s5] sm:$0x1]
        %v553 = vld [vmem:[#allocation2] sm:$0xff]
        %v554 = vld [vmem:[#allocation3] sm:$0xff]
        %556 = vrot.lane.b32.xlu0 %v554, 32
        %v557 = vpop.permute.xlu0 %556
        %vm559 = vcmask 261120
        %v560 = vsel %vm559, %v553, %v557
        %vm561 = vcmask 523264
        %v563 = vsel %vm561, %v560, 0
        %565 = vmatpush.msra.mxu0 0.0
        %566 = vmatpush.msra.mxu0 0.0
        %567 = vmatpush.msra.mxu0 0.0
        %568 = vmatpush.msra.mxu0 0.0
        %569 = vmatpush.msra.mxu0 0.0
        %570 = vmatpush.msra.mxu0 0.0
        %571 = vmatpush.msra.mxu0 0.0
        %572 = vmatpush.msra.mxu0 0.0
        %573 = vmatpush.msra.mxu0 %v550
        %574 = vmatpush.msra.mxu0 %v548
        %575 = vmatpush.msra.mxu0 %v546
        %576 = vmatpush.msra.mxu0 %v544
        %577 = vmatpush.msra.mxu0 %v542
        %578 = vmatpush.msra.mxu0 %v540
        %579 = vmatpush.msra.mxu0 %v538
        %580 = vmatpush.msra.mxu0 %v536
        %581 = vmatmul.f32.gmra.mxu0 %v563
        %v582 = vpop.f32.mrf.mxu0
        %v583 = vadd.f32 0.0, %v582
        %584 = vdwg.mxu0
        %585 = vmatpush.msra.mxu0 0.0
        %586 = vmatpush.msra.mxu0 0.0
        %587 = vmatpush.msra.mxu0 0.0
        %588 = vmatpush.msra.mxu0 0.0
        %589 = vmatpush.msra.mxu0 0.0
        %590 = vmatpush.msra.mxu0 0.0
        %591 = vmatpush.msra.mxu0 0.0
        %592 = vmatpush.msra.mxu0 0.0
        %593 = vmatpush.msra.mxu0 %v551
        %594 = vmatpush.msra.mxu0 %v549
        %595 = vmatpush.msra.mxu0 %v547
        %596 = vmatpush.msra.mxu0 %v545
        %597 = vmatpush.msra.mxu0 %v543
        %598 = vmatpush.msra.mxu0 %v541
        %599 = vmatpush.msra.mxu0 %v539
        %600 = vmatpush.msra.mxu0 %v537
        %601 = vmatmul.f32.gmra.mxu0 %v563
        %v602 = vpop.f32.mrf.mxu0
        %v603 = vadd.f32 0.0, %v602
        %604 = vdwg.mxu0
        %v605 = vld [vmem:[%s380] sm:$0xff]
        %v606 = vadd.f32 %v605, 2.7182817
        %v607 = vlog2.pop %v606
        %v608 = vmul.f32 %v607, 0.6931472
        %v609 = vrcp.pop %v608
        %v610 = vmul.f32 %v608, %v609
        %v611 = vsub.f32 1.0, %v610
        %v612 = vmul.f32 %v609, %v611
        %v613 = vadd.f32 %v609, %v612
        %vm614 = vweird.f32 %v608
        %vm615 = vweird.f32 %v609
        %vm616 = vmor %vm614, %vm615
        %v617 = vsel %vm616, %v609, %v613
        %v618 = vand.u32 2147483647, %v608
        %vm619 = vcmp.eq.f32.partialorder %v618, 8.507059e+37
        %v620 = vand.u32 %v608, 2147483648
        %v621 = vor.u32 1.1754944e-38, %v620
        %v622 = vsel %vm619, %v621, %v617
        %v623 = vmul.f32 1.0, %v622
        %v625 = vperm.slane %v552, 0
        %v627 = vadd.f32 %v603, %v625
        %v628 = vtanh.pop %v627
        %v629 = vsub.f32 %v554, %v628
        %631 = vset.pattern.permute.xlu0 0
        %632 = vperm.xlu0 %631, %v623
        %v633 = vpop.permute.xlu0 %632
        %v635 = vmul.f32 %v633, %v628
        %v636 = vadd.f32 %v629, %v635
        %v637 = vld [vmem:[#allocation4] sm:$0xff]
        %v638 = vadd.f32 %v637, %v583
        %v639 = vxor.u32 %v638, 2147483648
        %v640 = vmul.f32 %v639, 1.442695
        %v641 = vpow.pop %v640
        %v642 = vadd.f32 %v641, 1.0
        %v643 = vrcp.pop %v642
        %v644 = vmul.f32 %v642, %v643
        %v645 = vsub.f32 1.0, %v644
        %v646 = vmul.f32 %v643, %v645
        %v647 = vadd.f32 %v643, %v646
        %vm648 = vweird.f32 %v642
        %vm649 = vweird.f32 %v643
        %vm650 = vmor %vm648, %vm649
        %v651 = vsel %vm650, %v643, %v647
        %v652 = vand.u32 2147483647, %v642
        %vm653 = vcmp.eq.f32.partialorder %v652, 8.507059e+37
        %v654 = vand.u32 %v642, 2147483648
        %v655 = vor.u32 1.1754944e-38, %v654
        %v656 = vsel %vm653, %v655, %v651
        %v657 = vmul.f32 1.0, %v656
        %659 = vrot.lane.b32.xlu0 %v636, 32
        %v660 = vpop.permute.xlu0 %659
        %v662 = vmul.f32 %v657, %v660
        %664 = vrot.lane.b32.xlu0 %v657, 32
        %v665 = vpop.permute.xlu0 %664
        %v667 = vmul.f32 %v657, %v665
        %669 = vrot.lane.b32.xlu0 %v667, 32
        %v670 = vpop.permute.xlu0 %669
        %v672 = vadd.f32 %v662, %v670
        %v673 = vtanh.pop %v672
        %675 = vrot.lane.b32.xlu0 %v673, 32
        %v676 = vpop.permute.xlu0 %675
        %v678 = vmul.f32 %v657, %v676
        %s679 = smul.u32 %s31, 8
        %p680 = scmp.eq.s32.totalorder %s679, 7
        // Predicated region
        $region87: #{tpu_custom_call.1} parent=77 // pred_check
          %p681 = pneg %p680
        $region88: #{tpu_custom_call.1} parent=77 // pred_check_branch
          %683 = sbr.rel (%p681) target = $region90
        $region89: #{tpu_custom_call.1} parent=77 // pred_region
          %685 = vrot.lane.b32.xlu0 %v678, 64
          %v686 = vpop.permute.xlu0 %685
          %688 = vst.msk [vmem:[%s422] sm:$0xff] %vm559, %v686
          %690 = vrot.lane.b32.xlu0 %v672, 96
          %v691 = vpop.permute.xlu0 %690
          %693 = vst.msk [vmem:[%s429] sm:$0xff] %vm559, %v691
        $region90: #{tpu_custom_call.1} parent=77 // pred_fallthru
          _
        %695 = vrot.lane.b32.xlu0 %v678, 64
        %v696 = vpop.permute.xlu0 %695
        %v698 = vsel %vm559, %v696, %v672
        %v700 = vsel %vm561, %v698, 0
        %702 = vmatpush.msra.mxu0 0.0
        %703 = vmatpush.msra.mxu0 0.0
        %704 = vmatpush.msra.mxu0 0.0
        %705 = vmatpush.msra.mxu0 0.0
        %706 = vmatpush.msra.mxu0 0.0
        %707 = vmatpush.msra.mxu0 0.0
        %708 = vmatpush.msra.mxu0 0.0
        %709 = vmatpush.msra.mxu0 0.0
        %710 = vmatpush.msra.mxu0 %v550
        %711 = vmatpush.msra.mxu0 %v548
        %712 = vmatpush.msra.mxu0 %v546
        %713 = vmatpush.msra.mxu0 %v544
        %714 = vmatpush.msra.mxu0 %v542
        %715 = vmatpush.msra.mxu0 %v540
        %716 = vmatpush.msra.mxu0 %v538
        %717 = vmatpush.msra.mxu0 %v536
        %718 = vmatmul.f32.gmra.mxu0 %v700
        %v719 = vpop.f32.mrf.mxu0
        %v720 = vadd.f32 0.0, %v719
        %721 = vdwg.mxu0
        %722 = vmatpush.msra.mxu0 0.0
        %723 = vmatpush.msra.mxu0 0.0
        %724 = vmatpush.msra.mxu0 0.0
        %725 = vmatpush.msra.mxu0 0.0
        %726 = vmatpush.msra.mxu0 0.0
        %727 = vmatpush.msra.mxu0 0.0
        %728 = vmatpush.msra.mxu0 0.0
        %729 = vmatpush.msra.mxu0 0.0
        %730 = vmatpush.msra.mxu0 %v551
        %731 = vmatpush.msra.mxu0 %v549
        %732 = vmatpush.msra.mxu0 %v547
        %733 = vmatpush.msra.mxu0 %v545
        %734 = vmatpush.msra.mxu0 %v543
        %735 = vmatpush.msra.mxu0 %v541
        %736 = vmatpush.msra.mxu0 %v539
        %737 = vmatpush.msra.mxu0 %v537
        %738 = vmatmul.f32.gmra.mxu0 %v700
        %v739 = vpop.f32.mrf.mxu0
        %v740 = vadd.f32 0.0, %v739
        %741 = vdwg.mxu0
        %s742 = scalar_lea.vmem %s380, 8 [#allocation5]
        %v743 = vld [vmem:[%s742] sm:$0xff]
        %v744 = vadd.f32 %v743, 2.7182817
        %v745 = vlog2.pop %v744
        %v746 = vmul.f32 %v745, 0.6931472
        %v747 = vrcp.pop %v746
        %v748 = vmul.f32 %v746, %v747
        %v749 = vsub.f32 1.0, %v748
        %v750 = vmul.f32 %v747, %v749
        %v751 = vadd.f32 %v747, %v750
        %vm752 = vweird.f32 %v746
        %vm753 = vweird.f32 %v747
        %vm754 = vmor %vm752, %vm753
        %v755 = vsel %vm754, %v747, %v751
        %v756 = vand.u32 2147483647, %v746
        %vm757 = vcmp.eq.f32.partialorder %v756, 8.507059e+37
        %v758 = vand.u32 %v746, 2147483648
        %v759 = vor.u32 1.1754944e-38, %v758
        %v760 = vsel %vm757, %v759, %v755
        %v761 = vmul.f32 1.0, %v760
        %v762 = vadd.f32 %v740, %v625
        %v763 = vtanh.pop %v762
        %765 = vrot.lane.b32.xlu0 %v763, 32
        %v766 = vpop.permute.xlu0 %765
        %v768 = vsub.f32 %v672, %v766
        %770 = vset.pattern.permute.xlu0 0
        %771 = vperm.xlu0 %770, %v761
        %v772 = vpop.permute.xlu0 %771
        %v774 = vmul.f32 %v772, %v763
        %776 = vrot.lane.b32.xlu0 %v774, 32
        %v777 = vpop.permute.xlu0 %776
        %v779 = vadd.f32 %v768, %v777
        %s780 = scalar_lea.vmem [#allocation4], 8
        %v781 = vld [vmem:[%s780] sm:$0xff]
        %v782 = vadd.f32 %v781, %v720
        %v783 = vxor.u32 %v782, 2147483648
        %v784 = vmul.f32 %v783, 1.442695
        %v785 = vpow.pop %v784
        %v786 = vadd.f32 %v785, 1.0
        %v787 = vrcp.pop %v786
        %v788 = vmul.f32 %v786, %v787
        %v789 = vsub.f32 1.0, %v788
        %v790 = vmul.f32 %v787, %v789
        %v791 = vadd.f32 %v787, %v790
        %vm792 = vweird.f32 %v786
        %vm793 = vweird.f32 %v787
        %vm794 = vmor %vm792, %vm793
        %v795 = vsel %vm794, %v787, %v791
        %v796 = vand.u32 2147483647, %v786
        %vm797 = vcmp.eq.f32.partialorder %v796, 8.507059e+37
        %v798 = vand.u32 %v786, 2147483648
        %v799 = vor.u32 1.1754944e-38, %v798
        %v800 = vsel %vm797, %v799, %v795
        %v801 = vmul.f32 1.0, %v800
        %v802 = vmul.f32 %v801, %v779
        %804 = vrot.lane.b32.xlu0 %v801, 32
        %v805 = vpop.permute.xlu0 %804
        %v807 = vmul.f32 %v801, %v805
        %809 = vrot.lane.b32.xlu0 %v807, 32
        %v810 = vpop.permute.xlu0 %809
        %v812 = vadd.f32 %v802, %v810
        %v813 = vtanh.pop %v812
        %815 = vrot.lane.b32.xlu0 %v813, 32
        %v816 = vpop.permute.xlu0 %815
        %v818 = vmul.f32 %v801, %v816
        %s819 = sadd.s32 %s679, 1
        %p820 = scmp.eq.s32.totalorder %s819, 7
        // Predicated region
        $region91: #{tpu_custom_call.1} parent=77 // pred_check
          %p821 = pneg %p820
        $region92: #{tpu_custom_call.1} parent=77 // pred_check_branch
          %823 = sbr.rel (%p821) target = $region94
        $region93: #{tpu_custom_call.1} parent=77 // pred_region
          %825 = vrot.lane.b32.xlu0 %v818, 64
          %v826 = vpop.permute.xlu0 %825
          %828 = vst.msk [vmem:[%s422] sm:$0xff] %vm559, %v826
          %830 = vrot.lane.b32.xlu0 %v812, 96
          %v831 = vpop.permute.xlu0 %830
          %833 = vst.msk [vmem:[%s429] sm:$0xff] %vm559, %v831
        $region94: #{tpu_custom_call.1} parent=77 // pred_fallthru
          _
        %835 = vrot.lane.b32.xlu0 %v818, 64
        %v836 = vpop.permute.xlu0 %835
        %v838 = vsel %vm559, %v836, %v812
        %v840 = vsel %vm561, %v838, 0
        %842 = vmatpush.msra.mxu0 0.0
        %843 = vmatpush.msra.mxu0 0.0
        %844 = vmatpush.msra.mxu0 0.0
        %845 = vmatpush.msra.mxu0 0.0
        %846 = vmatpush.msra.mxu0 0.0
        %847 = vmatpush.msra.mxu0 0.0
        %848 = vmatpush.msra.mxu0 0.0
        %849 = vmatpush.msra.mxu0 0.0
        %850 = vmatpush.msra.mxu0 %v550
        %851 = vmatpush.msra.mxu0 %v548
        %852 = vmatpush.msra.mxu0 %v546
        %853 = vmatpush.msra.mxu0 %v544
        %854 = vmatpush.msra.mxu0 %v542
        %855 = vmatpush.msra.mxu0 %v540
        %856 = vmatpush.msra.mxu0 %v538
        %857 = vmatpush.msra.mxu0 %v536
        %858 = vmatmul.f32.gmra.mxu0 %v840
        %v859 = vpop.f32.mrf.mxu0
        %v860 = vadd.f32 0.0, %v859
        %861 = vdwg.mxu0
        %862 = vmatpush.msra.mxu0 0.0
        %863 = vmatpush.msra.mxu0 0.0
        %864 = vmatpush.msra.mxu0 0.0
        %865 = vmatpush.msra.mxu0 0.0
        %866 = vmatpush.msra.mxu0 0.0
        %867 = vmatpush.msra.mxu0 0.0
        %868 = vmatpush.msra.mxu0 0.0
        %869 = vmatpush.msra.mxu0 0.0
        %870 = vmatpush.msra.mxu0 %v551
        %871 = vmatpush.msra.mxu0 %v549
        %872 = vmatpush.msra.mxu0 %v547
        %873 = vmatpush.msra.mxu0 %v545
        %874 = vmatpush.msra.mxu0 %v543
        %875 = vmatpush.msra.mxu0 %v541
        %876 = vmatpush.msra.mxu0 %v539
        %877 = vmatpush.msra.mxu0 %v537
        %878 = vmatmul.f32.gmra.mxu0 %v840
        %v879 = vpop.f32.mrf.mxu0
        %v880 = vadd.f32 0.0, %v879
        %881 = vdwg.mxu0
        %s882 = scalar_lea.vmem %s380, 16 [#allocation5]
        %v883 = vld [vmem:[%s882] sm:$0xff]
        %v884 = vadd.f32 %v883, 2.7182817
        %v885 = vlog2.pop %v884
        %v886 = vmul.f32 %v885, 0.6931472
        %v887 = vrcp.pop %v886
        %v888 = vmul.f32 %v886, %v887
        %v889 = vsub.f32 1.0, %v888
        %v890 = vmul.f32 %v887, %v889
        %v891 = vadd.f32 %v887, %v890
        %vm892 = vweird.f32 %v886
        %vm893 = vweird.f32 %v887
        %vm894 = vmor %vm892, %vm893
        %v895 = vsel %vm894, %v887, %v891
        %v896 = vand.u32 2147483647, %v886
        %vm897 = vcmp.eq.f32.partialorder %v896, 8.507059e+37
        %v898 = vand.u32 %v886, 2147483648
        %v899 = vor.u32 1.1754944e-38, %v898
        %v900 = vsel %vm897, %v899, %v895
        %v901 = vmul.f32 1.0, %v900
        %v902 = vadd.f32 %v880, %v625
        %v903 = vtanh.pop %v902
        %905 = vrot.lane.b32.xlu0 %v903, 32
        %v906 = vpop.permute.xlu0 %905
        %v908 = vsub.f32 %v812, %v906
        %910 = vset.pattern.permute.xlu0 0
        %911 = vperm.xlu0 %910, %v901
        %v912 = vpop.permute.xlu0 %911
        %v914 = vmul.f32 %v912, %v903
        %916 = vrot.lane.b32.xlu0 %v914, 32
        %v917 = vpop.permute.xlu0 %916
        %v919 = vadd.f32 %v908, %v917
        %s920 = scalar_lea.vmem [#allocation4], 16
        %v921 = vld [vmem:[%s920] sm:$0xff]
        %v922 = vadd.f32 %v921, %v860
        %v923 = vxor.u32 %v922, 2147483648
        %v924 = vmul.f32 %v923, 1.442695
        %v925 = vpow.pop %v924
        %v926 = vadd.f32 %v925, 1.0
        %v927 = vrcp.pop %v926
        %v928 = vmul.f32 %v926, %v927
        %v929 = vsub.f32 1.0, %v928
        %v930 = vmul.f32 %v927, %v929
        %v931 = vadd.f32 %v927, %v930
        %vm932 = vweird.f32 %v926
        %vm933 = vweird.f32 %v927
        %vm934 = vmor %vm932, %vm933
        %v935 = vsel %vm934, %v927, %v931
        %v936 = vand.u32 2147483647, %v926
        %vm937 = vcmp.eq.f32.partialorder %v936, 8.507059e+37
        %v938 = vand.u32 %v926, 2147483648
        %v939 = vor.u32 1.1754944e-38, %v938
        %v940 = vsel %vm937, %v939, %v935
        %v941 = vmul.f32 1.0, %v940
        %v942 = vmul.f32 %v941, %v919
        %944 = vrot.lane.b32.xlu0 %v941, 32
        %v945 = vpop.permute.xlu0 %944
        %v947 = vmul.f32 %v941, %v945
        %949 = vrot.lane.b32.xlu0 %v947, 32
        %v950 = vpop.permute.xlu0 %949
        %v952 = vadd.f32 %v942, %v950
        %v953 = vtanh.pop %v952
        %955 = vrot.lane.b32.xlu0 %v953, 32
        %v956 = vpop.permute.xlu0 %955
        %v958 = vmul.f32 %v941, %v956
        %s959 = sadd.s32 %s679, 2
        %p960 = scmp.eq.s32.totalorder %s959, 7
        // Predicated region
        $region95: #{tpu_custom_call.1} parent=77 // pred_check
          %p961 = pneg %p960
        $region96: #{tpu_custom_call.1} parent=77 // pred_check_branch
          %963 = sbr.rel (%p961) target = $region98
        $region97: #{tpu_custom_call.1} parent=77 // pred_region
          %965 = vrot.lane.b32.xlu0 %v958, 64
          %v966 = vpop.permute.xlu0 %965
          %968 = vst.msk [vmem:[%s422] sm:$0xff] %vm559, %v966
          %970 = vrot.lane.b32.xlu0 %v952, 96
          %v971 = vpop.permute.xlu0 %970
          %973 = vst.msk [vmem:[%s429] sm:$0xff] %vm559, %v971
        $region98: #{tpu_custom_call.1} parent=77 // pred_fallthru
          _
        %975 = vrot.lane.b32.xlu0 %v958, 64
        %v976 = vpop.permute.xlu0 %975
        %v978 = vsel %vm559, %v976, %v952
        %v980 = vsel %vm561, %v978, 0
        %982 = vmatpush.msra.mxu0 0.0
        %983 = vmatpush.msra.mxu0 0.0
        %984 = vmatpush.msra.mxu0 0.0
        %985 = vmatpush.msra.mxu0 0.0
        %986 = vmatpush.msra.mxu0 0.0
        %987 = vmatpush.msra.mxu0 0.0
        %988 = vmatpush.msra.mxu0 0.0
        %989 = vmatpush.msra.mxu0 0.0
        %990 = vmatpush.msra.mxu0 %v550
        %991 = vmatpush.msra.mxu0 %v548
        %992 = vmatpush.msra.mxu0 %v546
        %993 = vmatpush.msra.mxu0 %v544
        %994 = vmatpush.msra.mxu0 %v542
        %995 = vmatpush.msra.mxu0 %v540
        %996 = vmatpush.msra.mxu0 %v538
        %997 = vmatpush.msra.mxu0 %v536
        %998 = vmatmul.f32.gmra.mxu0 %v980
        %v999 = vpop.f32.mrf.mxu0
        %v1000 = vadd.f32 0.0, %v999
        %1001 = vdwg.mxu0
        %1002 = vmatpush.msra.mxu0 0.0
        %1003 = vmatpush.msra.mxu0 0.0
        %1004 = vmatpush.msra.mxu0 0.0
        %1005 = vmatpush.msra.mxu0 0.0
        %1006 = vmatpush.msra.mxu0 0.0
        %1007 = vmatpush.msra.mxu0 0.0
        %1008 = vmatpush.msra.mxu0 0.0
        %1009 = vmatpush.msra.mxu0 0.0
        %1010 = vmatpush.msra.mxu0 %v551
        %1011 = vmatpush.msra.mxu0 %v549
        %1012 = vmatpush.msra.mxu0 %v547
        %1013 = vmatpush.msra.mxu0 %v545
        %1014 = vmatpush.msra.mxu0 %v543
        %1015 = vmatpush.msra.mxu0 %v541
        %1016 = vmatpush.msra.mxu0 %v539
        %1017 = vmatpush.msra.mxu0 %v537
        %1018 = vmatmul.f32.gmra.mxu0 %v980
        %v1019 = vpop.f32.mrf.mxu0
        %v1020 = vadd.f32 0.0, %v1019
        %1021 = vdwg.mxu0
        %s1022 = scalar_lea.vmem %s380, 24 [#allocation5]
        %v1023 = vld [vmem:[%s1022] sm:$0xff]
        %v1024 = vadd.f32 %v1023, 2.7182817
        %v1025 = vlog2.pop %v1024
        %v1026 = vmul.f32 %v1025, 0.6931472
        %v1027 = vrcp.pop %v1026
        %v1028 = vmul.f32 %v1026, %v1027
        %v1029 = vsub.f32 1.0, %v1028
        %v1030 = vmul.f32 %v1027, %v1029
        %v1031 = vadd.f32 %v1027, %v1030
        %vm1032 = vweird.f32 %v1026
        %vm1033 = vweird.f32 %v1027
        %vm1034 = vmor %vm1032, %vm1033
        %v1035 = vsel %vm1034, %v1027, %v1031
        %v1036 = vand.u32 2147483647, %v1026
        %vm1037 = vcmp.eq.f32.partialorder %v1036, 8.507059e+37
        %v1038 = vand.u32 %v1026, 2147483648
        %v1039 = vor.u32 1.1754944e-38, %v1038
        %v1040 = vsel %vm1037, %v1039, %v1035
        %v1041 = vmul.f32 1.0, %v1040
        %v1042 = vadd.f32 %v1020, %v625
        %v1043 = vtanh.pop %v1042
        %1045 = vrot.lane.b32.xlu0 %v1043, 32
        %v1046 = vpop.permute.xlu0 %1045
        %v1048 = vsub.f32 %v952, %v1046
        %1050 = vset.pattern.permute.xlu0 0
        %1051 = vperm.xlu0 %1050, %v1041
        %v1052 = vpop.permute.xlu0 %1051
        %v1054 = vmul.f32 %v1052, %v1043
        %1056 = vrot.lane.b32.xlu0 %v1054, 32
        %v1057 = vpop.permute.xlu0 %1056
        %v1059 = vadd.f32 %v1048, %v1057
        %s1060 = scalar_lea.vmem [#allocation4], 24
        %v1061 = vld [vmem:[%s1060] sm:$0xff]
        %v1062 = vadd.f32 %v1061, %v1000
        %v1063 = vxor.u32 %v1062, 2147483648
        %v1064 = vmul.f32 %v1063, 1.442695
        %v1065 = vpow.pop %v1064
        %v1066 = vadd.f32 %v1065, 1.0
        %v1067 = vrcp.pop %v1066
        %v1068 = vmul.f32 %v1066, %v1067
        %v1069 = vsub.f32 1.0, %v1068
        %v1070 = vmul.f32 %v1067, %v1069
        %v1071 = vadd.f32 %v1067, %v1070
        %vm1072 = vweird.f32 %v1066
        %vm1073 = vweird.f32 %v1067
        %vm1074 = vmor %vm1072, %vm1073
        %v1075 = vsel %vm1074, %v1067, %v1071
        %v1076 = vand.u32 2147483647, %v1066
        %vm1077 = vcmp.eq.f32.partialorder %v1076, 8.507059e+37
        %v1078 = vand.u32 %v1066, 2147483648
        %v1079 = vor.u32 1.1754944e-38, %v1078
        %v1080 = vsel %vm1077, %v1079, %v1075
        %v1081 = vmul.f32 1.0, %v1080
        %v1082 = vmul.f32 %v1081, %v1059
        %1084 = vrot.lane.b32.xlu0 %v1081, 32
        %v1085 = vpop.permute.xlu0 %1084
        %v1087 = vmul.f32 %v1081, %v1085
        %1089 = vrot.lane.b32.xlu0 %v1087, 32
        %v1090 = vpop.permute.xlu0 %1089
        %v1092 = vadd.f32 %v1082, %v1090
        %v1093 = vtanh.pop %v1092
        %1095 = vrot.lane.b32.xlu0 %v1093, 32
        %v1096 = vpop.permute.xlu0 %1095
        %v1098 = vmul.f32 %v1081, %v1096
        %s1099 = sadd.s32 %s679, 3
        %p1100 = scmp.eq.s32.totalorder %s1099, 7
        // Predicated region
        $region99: #{tpu_custom_call.1} parent=77 // pred_check
          %p1101 = pneg %p1100
        $region100: #{tpu_custom_call.1} parent=77 // pred_check_branch
          %1103 = sbr.rel (%p1101) target = $region102
        $region101: #{tpu_custom_call.1} parent=77 // pred_region
          %1105 = vrot.lane.b32.xlu0 %v1098, 64
          %v1106 = vpop.permute.xlu0 %1105
          %1108 = vst.msk [vmem:[%s422] sm:$0xff] %vm559, %v1106
          %1110 = vrot.lane.b32.xlu0 %v1092, 96
          %v1111 = vpop.permute.xlu0 %1110
          %1113 = vst.msk [vmem:[%s429] sm:$0xff] %vm559, %v1111
        $region102: #{tpu_custom_call.1} parent=77 // pred_fallthru
          _
        %1114 = vrot.lane.b32.xlu0 %v818, 96
        %v1115 = vpop.permute.xlu0 %1114
        %1118 = vrot.lane.b32.xlu0 %v1098, 32
        %v1119 = vpop.permute.xlu0 %1118
        %v1121 = vsel %vm559, %v696, %v1115
        %v1122 = vsel %vm561, %v1121, %v958
        %vm1123 = vcmask 785408
        %v1124 = vsel %vm1123, %v1122, %v1119
        %1125 = vst [vmem:[%s415] sm:$0xff] %v1124
        %1126 = vrot.lane.b32.xlu0 %v1098, 64
        %v1127 = vpop.permute.xlu0 %1126
        %v1129 = vsel %vm559, %v1127, %v1092
        %v1131 = vsel %vm561, %v1129, 0
        %1133 = vmatpush.msra.mxu0 0.0
        %1134 = vmatpush.msra.mxu0 0.0
        %1135 = vmatpush.msra.mxu0 0.0
        %1136 = vmatpush.msra.mxu0 0.0
        %1137 = vmatpush.msra.mxu0 0.0
        %1138 = vmatpush.msra.mxu0 0.0
        %1139 = vmatpush.msra.mxu0 0.0
        %1140 = vmatpush.msra.mxu0 0.0
        %1141 = vmatpush.msra.mxu0 %v550
        %1142 = vmatpush.msra.mxu0 %v548
        %1143 = vmatpush.msra.mxu0 %v546
        %1144 = vmatpush.msra.mxu0 %v544
        %1145 = vmatpush.msra.mxu0 %v542
        %1146 = vmatpush.msra.mxu0 %v540
        %1147 = vmatpush.msra.mxu0 %v538
        %1148 = vmatpush.msra.mxu0 %v536
        %1149 = vmatmul.f32.gmra.mxu0 %v1131
        %v1150 = vpop.f32.mrf.mxu0
        %v1151 = vadd.f32 0.0, %v1150
        %1152 = vdwg.mxu0
        %1153 = vmatpush.msra.mxu0 0.0
        %1154 = vmatpush.msra.mxu0 0.0
        %1155 = vmatpush.msra.mxu0 0.0
        %1156 = vmatpush.msra.mxu0 0.0
        %1157 = vmatpush.msra.mxu0 0.0
        %1158 = vmatpush.msra.mxu0 0.0
        %1159 = vmatpush.msra.mxu0 0.0
        %1160 = vmatpush.msra.mxu0 0.0
        %1161 = vmatpush.msra.mxu0 %v551
        %1162 = vmatpush.msra.mxu0 %v549
        %1163 = vmatpush.msra.mxu0 %v547
        %1164 = vmatpush.msra.mxu0 %v545
        %1165 = vmatpush.msra.mxu0 %v543
        %1166 = vmatpush.msra.mxu0 %v541
        %1167 = vmatpush.msra.mxu0 %v539
        %1168 = vmatpush.msra.mxu0 %v537
        %1169 = vmatmul.f32.gmra.mxu0 %v1131
        %v1170 = vpop.f32.mrf.mxu0
        %v1171 = vadd.f32 0.0, %v1170
        %1172 = vdwg.mxu0
        %s1173 = scalar_lea.vmem %s380, 32 [#allocation5]
        %v1174 = vld [vmem:[%s1173] sm:$0xff]
        %v1175 = vadd.f32 %v1174, 2.7182817
        %v1176 = vlog2.pop %v1175
        %v1177 = vmul.f32 %v1176, 0.6931472
        %v1178 = vrcp.pop %v1177
        %v1179 = vmul.f32 %v1177, %v1178
        %v1180 = vsub.f32 1.0, %v1179
        %v1181 = vmul.f32 %v1178, %v1180
        %v1182 = vadd.f32 %v1178, %v1181
        %vm1183 = vweird.f32 %v1177
        %vm1184 = vweird.f32 %v1178
        %vm1185 = vmor %vm1183, %vm1184
        %v1186 = vsel %vm1185, %v1178, %v1182
        %v1187 = vand.u32 2147483647, %v1177
        %vm1188 = vcmp.eq.f32.partialorder %v1187, 8.507059e+37
        %v1189 = vand.u32 %v1177, 2147483648
        %v1190 = vor.u32 1.1754944e-38, %v1189
        %v1191 = vsel %vm1188, %v1190, %v1186
        %v1192 = vmul.f32 1.0, %v1191
        %v1193 = vadd.f32 %v1171, %v625
        %v1194 = vtanh.pop %v1193
        %1196 = vrot.lane.b32.xlu0 %v1194, 32
        %v1197 = vpop.permute.xlu0 %1196
        %v1199 = vsub.f32 %v1092, %v1197
        %1201 = vset.pattern.permute.xlu0 0
        %1202 = vperm.xlu0 %1201, %v1192
        %v1203 = vpop.permute.xlu0 %1202
        %v1205 = vmul.f32 %v1203, %v1194
        %1207 = vrot.lane.b32.xlu0 %v1205, 32
        %v1208 = vpop.permute.xlu0 %1207
        %v1210 = vadd.f32 %v1199, %v1208
        %s1211 = scalar_lea.vmem [#allocation4], 32
        %v1212 = vld [vmem:[%s1211] sm:$0xff]
        %v1213 = vadd.f32 %v1212, %v1151
        %v1214 = vxor.u32 %v1213, 2147483648
        %v1215 = vmul.f32 %v1214, 1.442695
        %v1216 = vpow.pop %v1215
        %v1217 = vadd.f32 %v1216, 1.0
        %v1218 = vrcp.pop %v1217
        %v1219 = vmul.f32 %v1217, %v1218
        %v1220 = vsub.f32 1.0, %v1219
        %v1221 = vmul.f32 %v1218, %v1220
        %v1222 = vadd.f32 %v1218, %v1221
        %vm1223 = vweird.f32 %v1217
        %vm1224 = vweird.f32 %v1218
        %vm1225 = vmor %vm1223, %vm1224
        %v1226 = vsel %vm1225, %v1218, %v1222
        %v1227 = vand.u32 2147483647, %v1217
        %vm1228 = vcmp.eq.f32.partialorder %v1227, 8.507059e+37
        %v1229 = vand.u32 %v1217, 2147483648
        %v1230 = vor.u32 1.1754944e-38, %v1229
        %v1231 = vsel %vm1228, %v1230, %v1226
        %v1232 = vmul.f32 1.0, %v1231
        %v1233 = vmul.f32 %v1232, %v1210
        %1235 = vrot.lane.b32.xlu0 %v1232, 32
        %v1236 = vpop.permute.xlu0 %1235
        %v1238 = vmul.f32 %v1232, %v1236
        %1240 = vrot.lane.b32.xlu0 %v1238, 32
        %v1241 = vpop.permute.xlu0 %1240
        %v1243 = vadd.f32 %v1233, %v1241
        %v1244 = vtanh.pop %v1243
        %1246 = vrot.lane.b32.xlu0 %v1244, 32
        %v1247 = vpop.permute.xlu0 %1246
        %v1249 = vmul.f32 %v1232, %v1247
        %s1250 = sadd.s32 %s679, 4
        %p1251 = scmp.eq.s32.totalorder %s1250, 7
        // Predicated region
        $region103: #{tpu_custom_call.1} parent=77 // pred_check
          %p1252 = pneg %p1251
        $region104: #{tpu_custom_call.1} parent=77 // pred_check_branch
          %1254 = sbr.rel (%p1252) target = $region106
        $region105: #{tpu_custom_call.1} parent=77 // pred_region
          %1256 = vrot.lane.b32.xlu0 %v1249, 64
          %v1257 = vpop.permute.xlu0 %1256
          %1259 = vst.msk [vmem:[%s422] sm:$0xff] %vm559, %v1257
          %1261 = vrot.lane.b32.xlu0 %v1243, 96
          %v1262 = vpop.permute.xlu0 %1261
          %1264 = vst.msk [vmem:[%s429] sm:$0xff] %vm559, %v1262
        $region106: #{tpu_custom_call.1} parent=77 // pred_fallthru
          _
        %1266 = vrot.lane.b32.xlu0 %v1249, 64
        %v1267 = vpop.permute.xlu0 %1266
        %v1269 = vsel %vm559, %v1267, %v1243
        %v1271 = vsel %vm561, %v1269, 0
        %1273 = vmatpush.msra.mxu0 0.0
        %1274 = vmatpush.msra.mxu0 0.0
        %1275 = vmatpush.msra.mxu0 0.0
        %1276 = vmatpush.msra.mxu0 0.0
        %1277 = vmatpush.msra.mxu0 0.0
        %1278 = vmatpush.msra.mxu0 0.0
        %1279 = vmatpush.msra.mxu0 0.0
        %1280 = vmatpush.msra.mxu0 0.0
        %1281 = vmatpush.msra.mxu0 %v550
        %1282 = vmatpush.msra.mxu0 %v548
        %1283 = vmatpush.msra.mxu0 %v546
        %1284 = vmatpush.msra.mxu0 %v544
        %1285 = vmatpush.msra.mxu0 %v542
        %1286 = vmatpush.msra.mxu0 %v540
        %1287 = vmatpush.msra.mxu0 %v538
        %1288 = vmatpush.msra.mxu0 %v536
        %1289 = vmatmul.f32.gmra.mxu0 %v1271
        %v1290 = vpop.f32.mrf.mxu0
        %v1291 = vadd.f32 0.0, %v1290
        %1292 = vdwg.mxu0
        %1293 = vmatpush.msra.mxu0 0.0
        %1294 = vmatpush.msra.mxu0 0.0
        %1295 = vmatpush.msra.mxu0 0.0
        %1296 = vmatpush.msra.mxu0 0.0
        %1297 = vmatpush.msra.mxu0 0.0
        %1298 = vmatpush.msra.mxu0 0.0
        %1299 = vmatpush.msra.mxu0 0.0
        %1300 = vmatpush.msra.mxu0 0.0
        %1301 = vmatpush.msra.mxu0 %v551
        %1302 = vmatpush.msra.mxu0 %v549
        %1303 = vmatpush.msra.mxu0 %v547
        %1304 = vmatpush.msra.mxu0 %v545
        %1305 = vmatpush.msra.mxu0 %v543
        %1306 = vmatpush.msra.mxu0 %v541
        %1307 = vmatpush.msra.mxu0 %v539
        %1308 = vmatpush.msra.mxu0 %v537
        %1309 = vmatmul.f32.gmra.mxu0 %v1271
        %v1310 = vpop.f32.mrf.mxu0
        %v1311 = vadd.f32 0.0, %v1310
        %1312 = vdwg.mxu0
        %s1313 = scalar_lea.vmem %s380, 40 [#allocation5]
        %v1314 = vld [vmem:[%s1313] sm:$0xff]
        %v1315 = vadd.f32 %v1314, 2.7182817
        %v1316 = vlog2.pop %v1315
        %v1317 = vmul.f32 %v1316, 0.6931472
        %v1318 = vrcp.pop %v1317
        %v1319 = vmul.f32 %v1317, %v1318
        %v1320 = vsub.f32 1.0, %v1319
        %v1321 = vmul.f32 %v1318, %v1320
        %v1322 = vadd.f32 %v1318, %v1321
        %vm1323 = vweird.f32 %v1317
        %vm1324 = vweird.f32 %v1318
        %vm1325 = vmor %vm1323, %vm1324
        %v1326 = vsel %vm1325, %v1318, %v1322
        %v1327 = vand.u32 2147483647, %v1317
        %vm1328 = vcmp.eq.f32.partialorder %v1327, 8.507059e+37
        %v1329 = vand.u32 %v1317, 2147483648
        %v1330 = vor.u32 1.1754944e-38, %v1329
        %v1331 = vsel %vm1328, %v1330, %v1326
        %v1332 = vmul.f32 1.0, %v1331
        %v1333 = vadd.f32 %v1311, %v625
        %v1334 = vtanh.pop %v1333
        %1336 = vrot.lane.b32.xlu0 %v1334, 32
        %v1337 = vpop.permute.xlu0 %1336
        %v1339 = vsub.f32 %v1243, %v1337
        %1341 = vset.pattern.permute.xlu0 0
        %1342 = vperm.xlu0 %1341, %v1332
        %v1343 = vpop.permute.xlu0 %1342
        %v1345 = vmul.f32 %v1343, %v1334
        %1347 = vrot.lane.b32.xlu0 %v1345, 32
        %v1348 = vpop.permute.xlu0 %1347
        %v1350 = vadd.f32 %v1339, %v1348
        %s1351 = scalar_lea.vmem [#allocation4], 40
        %v1352 = vld [vmem:[%s1351] sm:$0xff]
        %v1353 = vadd.f32 %v1352, %v1291
        %v1354 = vxor.u32 %v1353, 2147483648
        %v1355 = vmul.f32 %v1354, 1.442695
        %v1356 = vpow.pop %v1355
        %v1357 = vadd.f32 %v1356, 1.0
        %v1358 = vrcp.pop %v1357
        %v1359 = vmul.f32 %v1357, %v1358
        %v1360 = vsub.f32 1.0, %v1359
        %v1361 = vmul.f32 %v1358, %v1360
        %v1362 = vadd.f32 %v1358, %v1361
        %vm1363 = vweird.f32 %v1357
        %vm1364 = vweird.f32 %v1358
        %vm1365 = vmor %vm1363, %vm1364
        %v1366 = vsel %vm1365, %v1358, %v1362
        %v1367 = vand.u32 2147483647, %v1357
        %vm1368 = vcmp.eq.f32.partialorder %v1367, 8.507059e+37
        %v1369 = vand.u32 %v1357, 2147483648
        %v1370 = vor.u32 1.1754944e-38, %v1369
        %v1371 = vsel %vm1368, %v1370, %v1366
        %v1372 = vmul.f32 1.0, %v1371
        %v1373 = vmul.f32 %v1372, %v1350
        %1375 = vrot.lane.b32.xlu0 %v1372, 32
        %v1376 = vpop.permute.xlu0 %1375
        %v1378 = vmul.f32 %v1372, %v1376
        %1380 = vrot.lane.b32.xlu0 %v1378, 32
        %v1381 = vpop.permute.xlu0 %1380
        %v1383 = vadd.f32 %v1373, %v1381
        %v1384 = vtanh.pop %v1383
        %1386 = vrot.lane.b32.xlu0 %v1384, 32
        %v1387 = vpop.permute.xlu0 %1386
        %v1389 = vmul.f32 %v1372, %v1387
        %s1390 = sadd.s32 %s679, 5
        %p1391 = scmp.eq.s32.totalorder %s1390, 7
        // Predicated region
        $region107: #{tpu_custom_call.1} parent=77 // pred_check
          %p1392 = pneg %p1391
        $region108: #{tpu_custom_call.1} parent=77 // pred_check_branch
          %1394 = sbr.rel (%p1392) target = $region110
        $region109: #{tpu_custom_call.1} parent=77 // pred_region
          %1396 = vrot.lane.b32.xlu0 %v1389, 64
          %v1397 = vpop.permute.xlu0 %1396
          %1399 = vst.msk [vmem:[%s422] sm:$0xff] %vm559, %v1397
          %1401 = vrot.lane.b32.xlu0 %v1383, 96
          %v1402 = vpop.permute.xlu0 %1401
          %1404 = vst.msk [vmem:[%s429] sm:$0xff] %vm559, %v1402
        $region110: #{tpu_custom_call.1} parent=77 // pred_fallthru
          _
        %1406 = vrot.lane.b32.xlu0 %v1389, 64
        %v1407 = vpop.permute.xlu0 %1406
        %v1409 = vsel %vm559, %v1407, %v1383
        %v1411 = vsel %vm561, %v1409, 0
        %1413 = vmatpush.msra.mxu0 0.0
        %1414 = vmatpush.msra.mxu0 0.0
        %1415 = vmatpush.msra.mxu0 0.0
        %1416 = vmatpush.msra.mxu0 0.0
        %1417 = vmatpush.msra.mxu0 0.0
        %1418 = vmatpush.msra.mxu0 0.0
        %1419 = vmatpush.msra.mxu0 0.0
        %1420 = vmatpush.msra.mxu0 0.0
        %1421 = vmatpush.msra.mxu0 %v550
        %1422 = vmatpush.msra.mxu0 %v548
        %1423 = vmatpush.msra.mxu0 %v546
        %1424 = vmatpush.msra.mxu0 %v544
        %1425 = vmatpush.msra.mxu0 %v542
        %1426 = vmatpush.msra.mxu0 %v540
        %1427 = vmatpush.msra.mxu0 %v538
        %1428 = vmatpush.msra.mxu0 %v536
        %1429 = vmatmul.f32.gmra.mxu0 %v1411
        %v1430 = vpop.f32.mrf.mxu0
        %v1431 = vadd.f32 0.0, %v1430
        %1432 = vdwg.mxu0
        %1433 = vmatpush.msra.mxu0 0.0
        %1434 = vmatpush.msra.mxu0 0.0
        %1435 = vmatpush.msra.mxu0 0.0
        %1436 = vmatpush.msra.mxu0 0.0
        %1437 = vmatpush.msra.mxu0 0.0
        %1438 = vmatpush.msra.mxu0 0.0
        %1439 = vmatpush.msra.mxu0 0.0
        %1440 = vmatpush.msra.mxu0 0.0
        %1441 = vmatpush.msra.mxu0 %v551
        %1442 = vmatpush.msra.mxu0 %v549
        %1443 = vmatpush.msra.mxu0 %v547
        %1444 = vmatpush.msra.mxu0 %v545
        %1445 = vmatpush.msra.mxu0 %v543
        %1446 = vmatpush.msra.mxu0 %v541
        %1447 = vmatpush.msra.mxu0 %v539
        %1448 = vmatpush.msra.mxu0 %v537
        %1449 = vmatmul.f32.gmra.mxu0 %v1411
        %v1450 = vpop.f32.mrf.mxu0
        %v1451 = vadd.f32 0.0, %v1450
        %1452 = vdwg.mxu0
        %s1453 = scalar_lea.vmem %s380, 48 [#allocation5]
        %v1454 = vld [vmem:[%s1453] sm:$0xff]
        %v1455 = vadd.f32 %v1454, 2.7182817
        %v1456 = vlog2.pop %v1455
        %v1457 = vmul.f32 %v1456, 0.6931472
        %v1458 = vrcp.pop %v1457
        %v1459 = vmul.f32 %v1457, %v1458
        %v1460 = vsub.f32 1.0, %v1459
        %v1461 = vmul.f32 %v1458, %v1460
        %v1462 = vadd.f32 %v1458, %v1461
        %vm1463 = vweird.f32 %v1457
        %vm1464 = vweird.f32 %v1458
        %vm1465 = vmor %vm1463, %vm1464
        %v1466 = vsel %vm1465, %v1458, %v1462
        %v1467 = vand.u32 2147483647, %v1457
        %vm1468 = vcmp.eq.f32.partialorder %v1467, 8.507059e+37
        %v1469 = vand.u32 %v1457, 2147483648
        %v1470 = vor.u32 1.1754944e-38, %v1469
        %v1471 = vsel %vm1468, %v1470, %v1466
        %v1472 = vmul.f32 1.0, %v1471
        %v1473 = vadd.f32 %v1451, %v625
        %v1474 = vtanh.pop %v1473
        %1476 = vrot.lane.b32.xlu0 %v1474, 32
        %v1477 = vpop.permute.xlu0 %1476
        %v1479 = vsub.f32 %v1383, %v1477
        %1481 = vset.pattern.permute.xlu0 0
        %1482 = vperm.xlu0 %1481, %v1472
        %v1483 = vpop.permute.xlu0 %1482
        %v1485 = vmul.f32 %v1483, %v1474
        %1487 = vrot.lane.b32.xlu0 %v1485, 32
        %v1488 = vpop.permute.xlu0 %1487
        %v1490 = vadd.f32 %v1479, %v1488
        %s1491 = scalar_lea.vmem [#allocation4], 48
        %v1492 = vld [vmem:[%s1491] sm:$0xff]
        %v1493 = vadd.f32 %v1492, %v1431
        %v1494 = vxor.u32 %v1493, 2147483648
        %v1495 = vmul.f32 %v1494, 1.442695
        %v1496 = vpow.pop %v1495
        %v1497 = vadd.f32 %v1496, 1.0
        %v1498 = vrcp.pop %v1497
        %v1499 = vmul.f32 %v1497, %v1498
        %v1500 = vsub.f32 1.0, %v1499
        %v1501 = vmul.f32 %v1498, %v1500
        %v1502 = vadd.f32 %v1498, %v1501
        %vm1503 = vweird.f32 %v1497
        %vm1504 = vweird.f32 %v1498
        %vm1505 = vmor %vm1503, %vm1504
        %v1506 = vsel %vm1505, %v1498, %v1502
        %v1507 = vand.u32 2147483647, %v1497
        %vm1508 = vcmp.eq.f32.partialorder %v1507, 8.507059e+37
        %v1509 = vand.u32 %v1497, 2147483648
        %v1510 = vor.u32 1.1754944e-38, %v1509
        %v1511 = vsel %vm1508, %v1510, %v1506
        %v1512 = vmul.f32 1.0, %v1511
        %v1513 = vmul.f32 %v1512, %v1490
        %1515 = vrot.lane.b32.xlu0 %v1512, 32
        %v1516 = vpop.permute.xlu0 %1515
        %v1518 = vmul.f32 %v1512, %v1516
        %1520 = vrot.lane.b32.xlu0 %v1518, 32
        %v1521 = vpop.permute.xlu0 %1520
        %v1523 = vadd.f32 %v1513, %v1521
        %v1524 = vtanh.pop %v1523
        %1526 = vrot.lane.b32.xlu0 %v1524, 32
        %v1527 = vpop.permute.xlu0 %1526
        %v1529 = vmul.f32 %v1512, %v1527
        %s1530 = sadd.s32 %s679, 6
        %p1531 = scmp.eq.s32.totalorder %s1530, 7
        // Predicated region
        $region111: #{tpu_custom_call.1} parent=77 // pred_check
          %p1532 = pneg %p1531
        $region112: #{tpu_custom_call.1} parent=77 // pred_check_branch
          %1534 = sbr.rel (%p1532) target = $region114
        $region113: #{tpu_custom_call.1} parent=77 // pred_region
          %1536 = vrot.lane.b32.xlu0 %v1529, 64
          %v1537 = vpop.permute.xlu0 %1536
          %1539 = vst.msk [vmem:[%s422] sm:$0xff] %vm559, %v1537
          %1541 = vrot.lane.b32.xlu0 %v1523, 96
          %v1542 = vpop.permute.xlu0 %1541
          %1544 = vst.msk [vmem:[%s429] sm:$0xff] %vm559, %v1542
        $region114: #{tpu_custom_call.1} parent=77 // pred_fallthru
          _
        %1546 = vrot.lane.b32.xlu0 %v1529, 64
        %v1547 = vpop.permute.xlu0 %1546
        %v1549 = vsel %vm559, %v1547, %v1523
        %v1551 = vsel %vm561, %v1549, 0
        %1553 = vmatpush.msra.mxu0 0.0
        %1554 = vmatpush.msra.mxu0 0.0
        %1555 = vmatpush.msra.mxu0 0.0
        %1556 = vmatpush.msra.mxu0 0.0
        %1557 = vmatpush.msra.mxu0 0.0
        %1558 = vmatpush.msra.mxu0 0.0
        %1559 = vmatpush.msra.mxu0 0.0
        %1560 = vmatpush.msra.mxu0 0.0
        %1561 = vmatpush.msra.mxu0 %v550
        %1562 = vmatpush.msra.mxu0 %v548
        %1563 = vmatpush.msra.mxu0 %v546
        %1564 = vmatpush.msra.mxu0 %v544
        %1565 = vmatpush.msra.mxu0 %v542
        %1566 = vmatpush.msra.mxu0 %v540
        %1567 = vmatpush.msra.mxu0 %v538
        %1568 = vmatpush.msra.mxu0 %v536
        %1569 = vmatmul.f32.gmra.mxu0 %v1551
        %v1570 = vpop.f32.mrf.mxu0
        %v1571 = vadd.f32 0.0, %v1570
        %1572 = vdwg.mxu0
        %1573 = vmatpush.msra.mxu0 0.0
        %1574 = vmatpush.msra.mxu0 0.0
        %1575 = vmatpush.msra.mxu0 0.0
        %1576 = vmatpush.msra.mxu0 0.0
        %1577 = vmatpush.msra.mxu0 0.0
        %1578 = vmatpush.msra.mxu0 0.0
        %1579 = vmatpush.msra.mxu0 0.0
        %1580 = vmatpush.msra.mxu0 0.0
        %1581 = vmatpush.msra.mxu0 %v551
        %1582 = vmatpush.msra.mxu0 %v549
        %1583 = vmatpush.msra.mxu0 %v547
        %1584 = vmatpush.msra.mxu0 %v545
        %1585 = vmatpush.msra.mxu0 %v543
        %1586 = vmatpush.msra.mxu0 %v541
        %1587 = vmatpush.msra.mxu0 %v539
        %1588 = vmatpush.msra.mxu0 %v537
        %1589 = vmatmul.f32.gmra.mxu0 %v1551
        %v1590 = vpop.f32.mrf.mxu0
        %v1591 = vadd.f32 0.0, %v1590
        %1592 = vdwg.mxu0
        %s1593 = scalar_lea.vmem %s380, 56 [#allocation5]
        %v1594 = vld [vmem:[%s1593] sm:$0xff]
        %v1595 = vadd.f32 %v1594, 2.7182817
        %v1596 = vlog2.pop %v1595
        %v1597 = vmul.f32 %v1596, 0.6931472
        %v1598 = vrcp.pop %v1597
        %v1599 = vmul.f32 %v1597, %v1598
        %v1600 = vsub.f32 1.0, %v1599
        %v1601 = vmul.f32 %v1598, %v1600
        %v1602 = vadd.f32 %v1598, %v1601
        %vm1603 = vweird.f32 %v1597
        %vm1604 = vweird.f32 %v1598
        %vm1605 = vmor %vm1603, %vm1604
        %v1606 = vsel %vm1605, %v1598, %v1602
        %v1607 = vand.u32 2147483647, %v1597
        %vm1608 = vcmp.eq.f32.partialorder %v1607, 8.507059e+37
        %v1609 = vand.u32 %v1597, 2147483648
        %v1610 = vor.u32 1.1754944e-38, %v1609
        %v1611 = vsel %vm1608, %v1610, %v1606
        %v1612 = vmul.f32 1.0, %v1611
        %v1613 = vadd.f32 %v1591, %v625
        %v1614 = vtanh.pop %v1613
        %1616 = vrot.lane.b32.xlu0 %v1614, 32
        %v1617 = vpop.permute.xlu0 %1616
        %v1619 = vsub.f32 %v1523, %v1617
        %1621 = vset.pattern.permute.xlu0 0
        %1622 = vperm.xlu0 %1621, %v1612
        %v1623 = vpop.permute.xlu0 %1622
        %v1625 = vmul.f32 %v1623, %v1614
        %1627 = vrot.lane.b32.xlu0 %v1625, 32
        %v1628 = vpop.permute.xlu0 %1627
        %v1630 = vadd.f32 %v1619, %v1628
        %s1631 = scalar_lea.vmem [#allocation4], 56
        %v1632 = vld [vmem:[%s1631] sm:$0xff]
        %v1633 = vadd.f32 %v1632, %v1571
        %v1634 = vxor.u32 %v1633, 2147483648
        %v1635 = vmul.f32 %v1634, 1.442695
        %v1636 = vpow.pop %v1635
        %v1637 = vadd.f32 %v1636, 1.0
        %v1638 = vrcp.pop %v1637
        %v1639 = vmul.f32 %v1637, %v1638
        %v1640 = vsub.f32 1.0, %v1639
        %v1641 = vmul.f32 %v1638, %v1640
        %v1642 = vadd.f32 %v1638, %v1641
        %vm1643 = vweird.f32 %v1637
        %vm1644 = vweird.f32 %v1638
        %vm1645 = vmor %vm1643, %vm1644
        %v1646 = vsel %vm1645, %v1638, %v1642
        %v1647 = vand.u32 2147483647, %v1637
        %vm1648 = vcmp.eq.f32.partialorder %v1647, 8.507059e+37
        %v1649 = vand.u32 %v1637, 2147483648
        %v1650 = vor.u32 1.1754944e-38, %v1649
        %v1651 = vsel %vm1648, %v1650, %v1646
        %v1652 = vmul.f32 1.0, %v1651
        %v1653 = vmul.f32 %v1652, %v1630
        %1655 = vrot.lane.b32.xlu0 %v1652, 32
        %v1656 = vpop.permute.xlu0 %1655
        %v1658 = vmul.f32 %v1652, %v1656
        %1660 = vrot.lane.b32.xlu0 %v1658, 32
        %v1661 = vpop.permute.xlu0 %1660
        %v1663 = vadd.f32 %v1653, %v1661
        %v1664 = vtanh.pop %v1663
        %1666 = vrot.lane.b32.xlu0 %v1664, 32
        %v1667 = vpop.permute.xlu0 %1666
        %v1669 = vmul.f32 %v1652, %v1667
        %s1670 = sadd.s32 %s679, 7
        %p1671 = scmp.eq.s32.totalorder %s1670, 7
        // Predicated region
        $region115: #{tpu_custom_call.1} parent=77 // pred_check
          %p1672 = pneg %p1671
        $region116: #{tpu_custom_call.1} parent=77 // pred_check_branch
          %1674 = sbr.rel (%p1672) target = $region118
        $region117: #{tpu_custom_call.1} parent=77 // pred_region
          %1676 = vrot.lane.b32.xlu0 %v1669, 64
          %v1677 = vpop.permute.xlu0 %1676
          %1679 = vst.msk [vmem:[%s422] sm:$0xff] %vm559, %v1677
          %1681 = vrot.lane.b32.xlu0 %v1663, 96
          %v1682 = vpop.permute.xlu0 %1681
          %1684 = vst.msk [vmem:[%s429] sm:$0xff] %vm559, %v1682
        $region118: #{tpu_custom_call.1} parent=77 // pred_fallthru
          _
        %1685 = vrot.lane.b32.xlu0 %v1389, 96
        %v1686 = vpop.permute.xlu0 %1685
        %1689 = vrot.lane.b32.xlu0 %v1669, 32
        %v1690 = vpop.permute.xlu0 %1689
        %v1692 = vsel %vm559, %v1267, %v1686
        %v1693 = vsel %vm561, %v1692, %v1529
        %v1694 = vsel %vm1123, %v1693, %v1690
        %s1695 = scalar_lea.vmem %s415, 8 [#allocation6]
        %1696 = vst [vmem:[%s1695] sm:$0xff] %v1694
        %1697 = vrot.lane.b32.xlu0 %v1669, 64
        %v1698 = vpop.permute.xlu0 %1697
        %1700 = vst.msk [vmem:[#allocation2] sm:$0xff] %vm559, %v1698
        %1702 = vrot.lane.b32.xlu0 %v1663, 96
        %v1703 = vpop.permute.xlu0 %1702
        %1705 = vst.msk [vmem:[#allocation3] sm:$0xff] %vm559, %v1703
        %s1706 = sand.u32 %s188, 1
        %s1707 = scalar_lea.sflag [#allocation7], %s1706
        %s1708 = sand.u32 %s188, 1
        %s1709 = smul.addr %s1708, 16
        %s1710 = scalar_lea.vmem [#allocation6], %s1709
        %s1711 = sand.u32 %s26, 1
        %s1712 = scalar_lea.sflag [#allocation9], %s1711
        %s1713 = sand.u32 %s214, 1
        %s1714 = smul.addr %s1713, 8
        %s1715 = scalar_lea.vmem [#allocation8], %s1714
        %s1716 = sand.u32 %s26, 1
        %s1717 = scalar_lea.sflag [#allocation9], %s1716
        %s1718 = sand.u32 %s240, 1
        %s1719 = smul.addr %s1718, 8
        %s1720 = scalar_lea.vmem [#allocation10], %s1719
        // Predicated region
        $region119: #{tpu_custom_call.1} parent=77 // pred_check
          %p1721 = pneg %p198
        $region120: #{tpu_custom_call.1} parent=77 // pred_check_branch
          %1723 = sbr.rel (%p1721) target = $region122
        $region121: #{tpu_custom_call.1} parent=77 // pred_region
          %s1724 = smul.u32 2, %s31
          %1726 = vsyncadd %s1707, 0
          %s1727 = smul.addr %s1724, 2
          %s1728 = sadd.s32 %s30, %s1727
          %s1729 = smul.addr %s1728, 8
          %s1730 = scalar_lea.hbm %s6, %s1729
          %s1731 = sshll.u32 %s1710, 4
          %s1732 = int_to_ptr.vmem [resolvable:$true] %s1731
          %s1733 = sshll.u32 %s1730, 4
          %s1734 = int_to_ptr.hbm [resolvable:$true] %s1733
          %1739 = dma.vmem_to_hbm [thread:$0]  %s1732, 256, %s1734, %s1707, 128, 256, 8
        $region122: #{tpu_custom_call.1} parent=77 // pred_fallthru
          _
        // Predicated region
        $region123: #{tpu_custom_call.1} parent=77 // pred_check
          %p1740 = pneg %p224
        $region124: #{tpu_custom_call.1} parent=77 // pred_check_branch
          %1742 = sbr.rel (%p1740) target = $region126
        $region125: #{tpu_custom_call.1} parent=77 // pred_region
          %1744 = vsyncadd %s1712, 0
          %s1745 = smul.addr %s30, 8
          %s1746 = scalar_lea.hbm %s7, %s1745
          %s1748 = sshll.u32 %s1715, 4
          %s1749 = int_to_ptr.vmem [resolvable:$true] %s1748
          %s1750 = sshll.u32 %s1746, 4
          %s1751 = int_to_ptr.hbm [resolvable:$true] %s1750
          %1753 = dma.vmem_to_hbm [thread:$0]  %s1749, 128, %s1751, %s1712
        $region126: #{tpu_custom_call.1} parent=77 // pred_fallthru
          _
        // Predicated region
        $region127: #{tpu_custom_call.1} parent=77 // pred_check
          %p1754 = pneg %p250
        $region128: #{tpu_custom_call.1} parent=77 // pred_check_branch
          %1756 = sbr.rel (%p1754) target = $region130
        $region129: #{tpu_custom_call.1} parent=77 // pred_region
          %1758 = vsyncadd %s1717, 0
          %s1759 = smul.addr %s30, 8
          %s1760 = scalar_lea.hbm %s8, %s1759
          %s1762 = sshll.u32 %s1720, 4
          %s1763 = int_to_ptr.vmem [resolvable:$true] %s1762
          %s1764 = sshll.u32 %s1760, 4
          %s1765 = int_to_ptr.hbm [resolvable:$true] %s1764
          %1767 = dma.vmem_to_hbm [thread:$0]  %s1763, 128, %s1765, %s1717
        $region130: #{tpu_custom_call.1} parent=77 // pred_fallthru
          _
      $region78: #{tpu_custom_call.1} parent=5 // pred_fallthru
        _
      %p1768 = scmp.le.s32.totalorder 2, %s21
      // Predicated region
      $region131: #{tpu_custom_call.1} parent=5 // pred_check
        %p1769 = pneg %p1768
      $region132: #{tpu_custom_call.1} parent=5 // pred_check_branch
        %1771 = sbr.rel (%p1769) target = $region134
      $region133: #{tpu_custom_call.1} parent=5 // pred_region
        %s1772 = ssub.s32 %s21, 2
        // Predicated region
        $region135: #{tpu_custom_call.1} parent=133 // pred_check
          %p1773 = pneg %p204
        $region136: #{tpu_custom_call.1} parent=133 // pred_check_branch
          %1775 = sbr.rel (%p1773) target = $region138
        $region137: #{tpu_custom_call.1} parent=133 // pred_region
          %s1776 = sand.u32 %s189, 1
          %s1777 = scalar_lea.sflag [#allocation7], %s1776
          %s1778 = sand.u32 %s189, 1
          %s1779 = smul.addr %s1778, 16
          %s1780 = scalar_lea.vmem [#allocation6], %s1779
          %1782 = dma.done %s1777, 256
        $region138: #{tpu_custom_call.1} parent=133 // pred_fallthru
          _
        // Predicated region
        $region139: #{tpu_custom_call.1} parent=133 // pred_check
          %p1783 = pneg %p230
        $region140: #{tpu_custom_call.1} parent=133 // pred_check_branch
          %1785 = sbr.rel (%p1783) target = $region142
        $region141: #{tpu_custom_call.1} parent=133 // pred_region
          %s1786 = sand.u32 %s27, 1
          %s1787 = scalar_lea.sflag [#allocation9], %s1786
          %s1788 = sand.u32 %s215, 1
          %s1789 = smul.addr %s1788, 8
          %s1790 = scalar_lea.vmem [#allocation8], %s1789
          %1792 = dma.done %s1787, 128
        $region142: #{tpu_custom_call.1} parent=133 // pred_fallthru
          _
        // Predicated region
        $region143: #{tpu_custom_call.1} parent=133 // pred_check
          %p1793 = pneg %p256
        $region144: #{tpu_custom_call.1} parent=133 // pred_check_branch
          %1795 = sbr.rel (%p1793) target = $region146
        $region145: #{tpu_custom_call.1} parent=133 // pred_region
          %s1796 = sand.u32 %s27, 1
          %s1797 = scalar_lea.sflag [#allocation9], %s1796
          %s1798 = sand.u32 %s241, 1
          %s1799 = smul.addr %s1798, 8
          %s1800 = scalar_lea.vmem [#allocation10], %s1799
          %1802 = dma.done %s1797, 128
        $region146: #{tpu_custom_call.1} parent=133 // pred_fallthru
          _
      $region134: #{tpu_custom_call.1} parent=5 // pred_fallthru
        _
    $region6: #{tpu_custom_call.1} parent=1 // loop_footer
      %s25 = sadd.s32 1, %s21
    $region7: #{tpu_custom_call.1} parent=1 // loop_footer_branch
      %20 = sbr.rel target = $region3
    $region8: #{tpu_custom_call.1} parent=1 // loop_exit
      _
    %1803 = vsyncpa [#allocation7], 1
    %s1804 = scalar_lea.sflag [#allocation7], 1
    %1805 = vsyncpa %s1804, 1
    %1806 = vsyncpa [#allocation9], 1
    %s1807 = scalar_lea.sflag [#allocation9], 1
    %1808 = vsyncpa %s1807, 1

</llo_original>
